<compile_context>
chip_gen: v6e
topology: v6e:2x2x1
jax: 0.10.0
libtpu: 0.0.40
codegen_flags: <defaults>
</compile_context>

<pallas_src>
import functools

import jax
import jax.numpy as jnp
from jax.experimental import pallas as pl
from jax.experimental.pallas import tpu as pltpu

EPS = 1e-5
SOFTPLUS_THRESHOLD = 20.0      # torch.nn.Softplus default (beta=1, threshold=20)
LANE = 128                     # all feature dims padded to a multiple of this
STAT_ROWS = 8                  # one (8, F) sublane tile of stats per batch tile

# VMEM budgets.  v7x has 64 MiB physical VMEM per TensorCore (v5e/v6e: 128 MiB)
# but only 16/32 MiB *scoped* by default -> raise explicitly, stay under v7x.
VMEM_LIMIT_FUSED = 48 * 1024 * 1024
VMEM_LIMIT_STAGED = 32 * 1024 * 1024
FUSED_VMEM_BUDGET = 40 * 1024 * 1024   # above this footprint use the staged path


def _round_up(n, m):
    return ((n + m - 1) // m) * m


def _cdiv(a, b):
    return -(-a // b)


def _softplus(z):
    safe = jnp.minimum(z, SOFTPLUS_THRESHOLD)
    return jnp.where(z > SOFTPLUS_THRESHOLD, z, jnp.log1p(jnp.exp(safe)))


# ==========================================================================
# Fused single-call path (whole network in one kernel, everything in VMEM)
# ==========================================================================

def make_fused_kernel(n_rows, mask_rows):
    """Whole 5-layer forward on the full (padded) batch resident in VMEM."""
    inv_n = 1.0 / float(n_rows)

    def kernel(x_ref, w1, w2, w3, w4, w5, b5,
               g1, be1, g2, be2, g3, be3, g4, be4, out_ref):
        if mask_rows:
            row = jax.lax.broadcasted_iota(jnp.int32, (x_ref.shape[0], 1), 0)
            valid = row < n_rows

        h = x_ref[...]                                    # bf16 (B_pad, F0)
        for w_ref, g_ref, be_ref in ((w1, g1, be1), (w2, g2, be2),
                                     (w3, g3, be3), (w4, g4, be4)):
            # fc_k (bias dropped: cancelled by training-mode BN), f32 accum.
            z = jnp.dot(h, w_ref[...], preferred_element_type=jnp.float32)
            # Exact two-pass f32 batch statistics (biased variance).
            mean = jnp.sum(z, axis=0, keepdims=True) * inv_n
            d = z - mean
            if mask_rows:
                d = jnp.where(valid, d, 0.0)       # padded rows: no stats contribution
            var = jnp.sum(d * d, axis=0, keepdims=True) * inv_n
            scale = g_ref[...] * jax.lax.rsqrt(var + EPS)
            a = jnp.maximum(d * scale + be_ref[...], 0.0)
            if mask_rows:
                a = jnp.where(valid, a, 0.0)       # keep padded rows exactly zero
            h = a.astype(jnp.bfloat16)

        z = jnp.dot(h, w5[...], preferred_element_type=jnp.float32) + b5[...]
        out_ref[...] = _softplus(z)

    return kernel


def _forward_fused(x, p, out_features):
    B, in_features = x.shape
    F0 = p["w1"].shape[0]
    F_out = p["w5"].shape[1]
    B_pad = _round_up(B, 8)

    # Pre-cast to bf16 in the wrapper (halves input DMA, MXU consumes bf16).
    xp = (jnp.zeros((B_pad, F0), jnp.bfloat16)
          .at[:B, :in_features].set(x.astype(jnp.bfloat16)))

    vmem = pl.BlockSpec(memory_space=pltpu.MemorySpace.VMEM)
    out = pl.pallas_call(
        make_fused_kernel(B, B_pad != B),
        out_shape=jax.ShapeDtypeStruct((B_pad, F_out), jnp.float32),
        in_specs=[vmem] * 15,
        out_specs=vmem,
        compiler_params=pltpu.CompilerParams(vmem_limit_bytes=VMEM_LIMIT_FUSED),
    )(xp, p["w1"], p["w2"], p["w3"], p["w4"], p["w5"], p["b5"],
      p["g1"], p["be1"], p["g2"], p["be2"], p["g3"], p["be3"], p["g4"], p["be4"])

    return out[:B, :out_features]


def _fused_fits(batch, p):
    """Rough VMEM footprint check for the fused path (v7x-safe budget)."""
    b_pad = _round_up(batch, 8)
    widths = [p["w1"].shape[0]] + [p[f"w{n}"].shape[1] for n in range(1, 6)]
    weight_bytes = sum(int(p[f"w{n}"].size) * 2 for n in range(1, 6))
    act_bytes = 6 * b_pad * max(widths) * 4            # a few live f32 slabs
    io_bytes = b_pad * widths[0] * 2 + b_pad * widths[-1] * 4
    return weight_bytes + act_bytes + io_bytes <= FUSED_VMEM_BUDGET


# ==========================================================================
# Staged large-batch fallback (5 pallas_calls, batch axis fully "parallel")
# ==========================================================================

def _write_stats(z, sum_ref, sumsq_ref):
    """Per-tile feature sum / sum-of-squares of z (exact f32 reductions).

    Each grid step owns a distinct (STAT_ROWS, F) block, so the batch axis
    stays 'parallel' (both v7x TensorCores active); tiny XLA ops reduce the
    per-tile blocks between stages.
    """
    s = jnp.sum(z, axis=0, keepdims=True)
    ss = jnp.sum(z * z, axis=0, keepdims=True)
    sum_ref[...] = jnp.broadcast_to(s, sum_ref.shape)
    sumsq_ref[...] = jnp.broadcast_to(ss, sumsq_ref.shape)


def _first_stage_kernel(x_ref, w_ref, z_ref, sum_ref, sumsq_ref):
    """z1 = x @ W1 (bias cancelled by bn1) + stats of z1."""
    z = jnp.dot(x_ref[...], w_ref[...], preferred_element_type=jnp.float32)
    z_ref[...] = z.astype(jnp.bfloat16)     # bf16 intermediate: half HBM traffic
    _write_stats(z, sum_ref, sumsq_ref)


def make_mid_stage_kernel(tb, mask_rows, n_rows):
    """a = relu(z_prev*scale + shift); z_next = a @ W; stats of z_next."""
    def kernel(z_ref, scale_ref, shift_ref, w_ref, zout_ref, sum_ref, sumsq_ref):
        a = jnp.maximum(z_ref[...].astype(jnp.float32) * scale_ref[...]
                        + shift_ref[...], 0.0)
        if mask_rows:
            # cheap (tb,1) iota; padded batch rows must not pollute next stats
            row = (pl.program_id(0) * tb
                   + jax.lax.broadcasted_iota(jnp.int32, (tb, 1), 0))
            a = jnp.where(row < n_rows, a, 0.0)
        z = jnp.dot(a.astype(jnp.bfloat16), w_ref[...],
                    preferred_element_type=jnp.float32)
        zout_ref[...] = z.astype(jnp.bfloat16)
        _write_stats(z, sum_ref, sumsq_ref)
    return kernel


def _final_stage_kernel(z_ref, scale_ref, shift_ref, w_ref, b_ref, out_ref):
    """out = softplus( relu(z4*scale + shift) @ W5 + b5 )."""
    a = jnp.maximum(z_ref[...].astype(jnp.float32) * scale_ref[...]
                    + shift_ref[...], 0.0)
    z = jnp.dot(a.astype(jnp.bfloat16), w_ref[...],
                preferred_element_type=jnp.float32) + b_ref[...]
    out_ref[...] = _softplus(z)


def _affine_from_stats(stats_sum, stats_sumsq, gamma, beta, n_rows):
    """Fold BN into per-feature scale/shift: a = z*scale + shift.

    Note: E[z^2]-E[z]^2 in f32 — fine here because post-matmul activations are
    near zero-mean; the fused path uses an exact two-pass variance instead.
    """
    s = jnp.sum(stats_sum[::STAT_ROWS, :], axis=0, keepdims=True)
    ss = jnp.sum(stats_sumsq[::STAT_ROWS, :], axis=0, keepdims=True)
    n = jnp.float32(n_rows)
    mean = s / n
    var = jnp.maximum(ss / n - mean * mean, 0.0)    # biased batch variance
    scale = gamma * jax.lax.rsqrt(var + EPS)
    shift = beta - mean * scale
    return scale, shift


def _forward_staged(x, p, out_features, batch_tile):
    B, in_features = x.shape
    # widths[0] = padded input width, widths[k] = padded output width of fc_k
    widths = [p["w1"].shape[0]] + [p[f"w{n}"].shape[1] for n in range(1, 6)]

    tb = min(batch_tile, _round_up(B, 8))
    tb = max(8, (tb // 8) * 8)
    nb = _cdiv(B, tb)
    B_pad = nb * tb
    mask_rows = B_pad != B

    xp = (jnp.zeros((B_pad, widths[0]), jnp.bfloat16)
          .at[:B, :in_features].set(x.astype(jnp.bfloat16)))

    cp = pltpu.CompilerParams(dimension_semantics=("parallel",),
                              vmem_limit_bytes=VMEM_LIMIT_STAGED)

    def row_spec(F):
        return pl.BlockSpec((tb, F), lambda i: (i, 0))

    def vec_spec(F):
        # Constant-index block (Pallas still double-buffers it; at very large F
        # on v7x, pipeline_mode=pl.Buffered(1) would halve its resident VMEM).
        return pl.BlockSpec((1, F), lambda i: (0, 0))

    def mat_spec(Fi, Fo):
        return pl.BlockSpec((Fi, Fo), lambda i: (0, 0))

    def stat_spec(F):
        return pl.BlockSpec((STAT_ROWS, F), lambda i: (i, 0))

    def stage_outs(Fo):
        specs = (row_spec(Fo), stat_spec(Fo), stat_spec(Fo))
        shapes = (jax.ShapeDtypeStruct((B_pad, Fo), jnp.bfloat16),
                  jax.ShapeDtypeStruct((nb * STAT_ROWS, Fo), jnp.float32),
                  jax.ShapeDtypeStruct((nb * STAT_ROWS, Fo), jnp.float32))
        return specs, shapes

    # ---- stage 1: fc1 + stats of its output ------------------------------
    out_specs, out_shape = stage_outs(widths[1])
    z, s, ss = pl.pallas_call(
        _first_stage_kernel,
        grid=(nb,),
        in_specs=[row_spec(widths[0]), mat_spec(widths[0], widths[1])],
        out_specs=out_specs, out_shape=out_shape,
        compiler_params=cp,
    )(xp, p["w1"])

    # ---- stages 2..4: bn(prev)+relu -> fc_k + stats of its output --------
    mid_kernel = make_mid_stage_kernel(tb, mask_rows, B)
    for k in (1, 2, 3):
        Fi, Fo = widths[k], widths[k + 1]
        scale, shift = _affine_from_stats(s, ss, p[f"g{k}"], p[f"be{k}"], B)
        out_specs, out_shape = stage_outs(Fo)
        z, s, ss = pl.pallas_call(
            mid_kernel,
            grid=(nb,),
            in_specs=[row_spec(Fi), vec_spec(Fi), vec_spec(Fi), mat_spec(Fi, Fo)],
            out_specs=out_specs, out_shape=out_shape,
            compiler_params=cp,
        )(z, scale, shift, p[f"w{k + 1}"])

    # ---- final stage: bn4 + relu -> fc5 + bias -> softplus ---------------
    Fi, Fo = widths[4], widths[5]
    scale, shift = _affine_from_stats(s, ss, p["g4"], p["be4"], B)
    out = pl.pallas_call(
        _final_stage_kernel,
        grid=(nb,),
        in_specs=[row_spec(Fi), vec_spec(Fi), vec_spec(Fi),
                  mat_spec(Fi, Fo), vec_spec(Fo)],
        out_specs=pl.BlockSpec((tb, Fo), lambda i: (i, 0)),
        out_shape=jax.ShapeDtypeStruct((B_pad, Fo), jnp.float32),
        compiler_params=cp,
    )(z, scale, shift, p["w5"], p["b5"])

    return out[:B, :out_features]


# ==========================================================================
# Dispatcher
# ==========================================================================

@functools.partial(jax.jit,
                   static_argnames=("out_features", "batch_tile", "force_staged"))
def mlp_bn_forward(x, params, *, out_features, batch_tile=512, force_staged=False):
    """x: (B, in_features) f32.  params: padded device params (pad_params_for_tpu)."""
    if (not force_staged) and _fused_fits(x.shape[0], params):
        return _forward_fused(x, params, out_features)
    return _forward_staged(x, params, out_features, batch_tile)


# ==========================================================================
# Parameters (natural shapes for the reference, per-layer padded bf16 for TPU)
# ==========================================================================

def init_params(key, input_size, hidden_sizes, output_size):
    """Natural-shape f32 parameters matching the PyTorch module defaults."""
    sizes = [input_size] + list(hidden_sizes) + [output_size]
    keys = jax.random.split(key, 10)
    params = {}
    for n in range(5):
        fan_in, fan_out = sizes[n], sizes[n + 1]
        bound = 1.0 / jnp.sqrt(jnp.float32(fan_in))
        params[f"w{n + 1}"] = jax.random.uniform(
            keys[2 * n], (fan_in, fan_out), jnp.float32, -bound, bound)
        params[f"b{n + 1}"] = jax.random.uniform(
            keys[2 * n + 1], (1, fan_out), jnp.float32, -bound, bound)
    for n in range(1, 5):
        h = hidden_sizes[n - 1]
        params[f"g{n}"] = jnp.ones((1, h), jnp.float32)
        params[f"be{n}"] = jnp.zeros((1, h), jnp.float32)
    return params


def pad_params_for_tpu(params, input_size, hidden_sizes, output_size):
    """Per-layer zero-padding of feature dims to multiples of 128; weights bf16.
    Drops b1..b4 (dead under training-mode BatchNorm).  gamma MUST be padded
    with zeros (not ones) so padded lanes get scale=0 and stay exactly zero."""
    sizes = [input_size] + list(hidden_sizes) + [output_size]
    padded = [_round_up(s, LANE) for s in sizes]

    def pad_w(w, Fi, Fo):
        out = jnp.zeros((Fi, Fo), jnp.float32).at[:w.shape[0], :w.shape[1]].set(w)
        return out.astype(jnp.bfloat16)

    def pad_v(v, Fo):
        return jnp.zeros((1, Fo), jnp.float32).at[:, :v.shape[1]].set(v)

    dev = {}
    for n in range(1, 6):
        dev[f"w{n}"] = pad_w(params[f"w{n}"], padded[n - 1], padded[n])
    dev["b5"] = pad_v(params["b5"], padded[5])
    for n in range(1, 5):
        dev[f"g{n}"] = pad_v(params[f"g{n}"], padded[n])     # zero-padded gamma
        dev[f"be{n}"] = pad_v(params[f"be{n}"], padded[n])
    return dev


# ==========================================================================
# References
# ==========================================================================

def _bn_relu(h, gamma, beta):
    mean = jnp.mean(h, axis=0, keepdims=True)
    var = jnp.mean((h - mean) ** 2, axis=0, keepdims=True)
    return jnp.maximum((h - mean) * jax.lax.rsqrt(var + EPS) * gamma + beta, 0.0)


def reference_forward_f32(x, p):
    """Exact f32 forward of the PyTorch module (includes all biases)."""
    h = x
    for n in range(1, 5):
        h = _bn_relu(h @ p[f"w{n}"] + p[f"b{n}"], p[f"g{n}"], p[f"be{n}"])
    return _softplus(h @ p["w5"] + p["b5"])


def reference_forward_mirror(x, p):
    """Mirrors the fused kernel's recipe exactly: bf16 matmul operands, f32
    accumulation, pre-BN biases dropped, two-pass f32 batch statistics."""
    B = x.shape[0]
    inv_n = 1.0 / B
    h = x.astype(jnp.bfloat16)
    for n in range(1, 5):
        z = jnp.dot(h, p[f"w{n}"].astype(jnp.bfloat16),
                    preferred_element_type=jnp.float32)
        mean = jnp.sum(z, axis=0, keepdims=True) * inv_n
        d = z - mean
        var = jnp.sum(d * d, axis=0, keepdims=True) * inv_n
        scale = p[f"g{n}"] * jax.lax.rsqrt(var + EPS)
        h = jnp.maximum(d * scale + p[f"be{n}"], 0.0).astype(jnp.bfloat16)
    z = jnp.dot(h, p["w5"].astype(jnp.bfloat16),
                preferred_element_type=jnp.float32) + p["b5"]
    return _softplus(z)


# ==========================================================================

if __name__ == "__main__":
    INPUT, HIDDEN, OUTPUT = 16, [64, 64, 32, 32], 8

    key = jax.random.PRNGKey(0)
    kx1, kx2, kp = jax.random.split(key, 3)

    params = init_params(kp, INPUT, HIDDEN, OUTPUT)
    dev_params = pad_params_for_tpu(params, INPUT, HIDDEN, OUTPUT)

    # --- small batch: fused single-kernel path (exercises batch-pad masking) ---
    B1 = 60
    x1 = jax.random.normal(kx1, (B1, INPUT), jnp.float32)
    out1 = jax.block_until_ready(mlp_bn_forward(x1, dev_params, out_features=OUTPUT))
    assert out1.shape == (B1, OUTPUT)
    assert jnp.allclose(out1, reference_forward_mirror(x1, params),
                        atol=2e-3, rtol=2e-3), "fused: mismatch vs bf16 mirror"
    assert jnp.allclose(out1, reference_forward_f32(x1, params),
                        atol=5e-2, rtol=5e-2), "fused: mismatch vs f32 reference"

    # --- larger batch: staged fallback (multi-tile grid, per-tile stats,
    #     padded-row masking); small tile only to exercise tiling at demo scale ---
    B2 = 200
    x2 = jax.random.normal(kx2, (B2, INPUT), jnp.float32)
    out2 = jax.block_until_ready(
        mlp_bn_forward(x2, dev_params, out_features=OUTPUT,
                       batch_tile=64, force_staged=True))
    assert out2.shape == (B2, OUTPUT)
    assert jnp.allclose(out2, reference_forward_f32(x2, params),
                        atol=5e-2, rtol=5e-2), "staged: mismatch vs f32 reference"

    print("KERNEL_OK")
</pallas_src>

<mosaic_0001>
module attributes {stable_mosaic.version = 11 : i64} {
  func.func @kernel(%arg0: memref<64x128xbf16, #tpu.memory_space<vmem>>, %arg1: memref<128x128xbf16, #tpu.memory_space<vmem>>, %arg2: memref<128x128xbf16, #tpu.memory_space<vmem>>, %arg3: memref<128x128xbf16, #tpu.memory_space<vmem>>, %arg4: memref<128x128xbf16, #tpu.memory_space<vmem>>, %arg5: memref<128x128xbf16, #tpu.memory_space<vmem>>, %arg6: memref<1x128xf32, #tpu.memory_space<vmem>>, %arg7: memref<1x128xf32, #tpu.memory_space<vmem>>, %arg8: memref<1x128xf32, #tpu.memory_space<vmem>>, %arg9: memref<1x128xf32, #tpu.memory_space<vmem>>, %arg10: memref<1x128xf32, #tpu.memory_space<vmem>>, %arg11: memref<1x128xf32, #tpu.memory_space<vmem>>, %arg12: memref<1x128xf32, #tpu.memory_space<vmem>>, %arg13: memref<1x128xf32, #tpu.memory_space<vmem>>, %arg14: memref<1x128xf32, #tpu.memory_space<vmem>>, %arg15: memref<64x128xf32, #tpu.memory_space<vmem>>) attributes {dimension_semantics = [], scalar_prefetch = 0 : i64, scratch_operands = 0 : i64, tpu.core_type = #tpu.core_type<tc>} {
    %0 = tpu.iota {dimensions = array<i32: 0>} : vector<64x1xi32>
    %c60_i32 = arith.constant 60 : i32
    %1 = vector.broadcast %c60_i32 : i32 to vector<64x1xi32>
    %2 = arith.cmpi slt, %0, %1 : vector<64x1xi32>
    %c0 = arith.constant 0 : index
    %c0_0 = arith.constant 0 : index
    %3 = vector.load %arg0[%c0, %c0_0] : memref<64x128xbf16, #tpu.memory_space<vmem>>, vector<64x128xbf16>
    %c0_1 = arith.constant 0 : index
    %c0_2 = arith.constant 0 : index
    %4 = vector.load %arg1[%c0_1, %c0_2] : memref<128x128xbf16, #tpu.memory_space<vmem>>, vector<128x128xbf16>
    %cst = arith.constant dense<0.000000e+00> : vector<64x128xf32>
    %5 = tpu.matmul %3, %4, %cst {dimension_numbers = #tpu.dot_dimension_numbers<[1], [0], [0], [1], [0, 0, 1, 1], [], []>} : vector<64x128xbf16>, vector<128x128xbf16>, vector<64x128xf32> -> vector<64x128xf32>
    %cst_3 = arith.constant dense<0.000000e+00> : vector<128xf32>
    %6 = vector.multi_reduction <add>, %5, %cst_3 [0] : vector<64x128xf32> to vector<128xf32>
    %7 = vector.shape_cast %6 : vector<128xf32> to vector<1x128xf32>
    %cst_4 = arith.constant 0.0166666675 : f32
    %8 = vector.broadcast %cst_4 : f32 to vector<1x128xf32>
    %9 = arith.mulf %7, %8 : vector<1x128xf32>
    %10 = vector.broadcast %9 : vector<1x128xf32> to vector<64x128xf32>
    %11 = arith.subf %5, %10 : vector<64x128xf32>
    %cst_5 = arith.constant 0.000000e+00 : f32
    %12 = vector.shape_cast %2 : vector<64x1xi1> to vector<64x1xi1>
    %13 = vector.broadcast %12 : vector<64x1xi1> to vector<64x128xi1>
    %14 = vector.broadcast %cst_5 : f32 to vector<64x128xf32>
    %15 = arith.select %13, %11, %14 : vector<64x128xi1>, vector<64x128xf32>
    %16 = arith.mulf %15, %15 : vector<64x128xf32>
    %cst_6 = arith.constant dense<0.000000e+00> : vector<128xf32>
    %17 = vector.multi_reduction <add>, %16, %cst_6 [0] : vector<64x128xf32> to vector<128xf32>
    %18 = vector.shape_cast %17 : vector<128xf32> to vector<1x128xf32>
    %cst_7 = arith.constant 0.0166666675 : f32
    %19 = vector.broadcast %cst_7 : f32 to vector<1x128xf32>
    %20 = arith.mulf %18, %19 : vector<1x128xf32>
    %c0_8 = arith.constant 0 : index
    %c0_9 = arith.constant 0 : index
    %21 = vector.load %arg7[%c0_8, %c0_9] : memref<1x128xf32, #tpu.memory_space<vmem>>, vector<1x128xf32>
    %cst_10 = arith.constant 9.99999974E-6 : f32
    %22 = vector.broadcast %cst_10 : f32 to vector<1x128xf32>
    %23 = arith.addf %20, %22 : vector<1x128xf32>
    %24 = math.rsqrt %23 : vector<1x128xf32>
    %25 = arith.mulf %21, %24 : vector<1x128xf32>
    %26 = vector.broadcast %25 : vector<1x128xf32> to vector<64x128xf32>
    %27 = arith.mulf %15, %26 : vector<64x128xf32>
    %c0_11 = arith.constant 0 : index
    %c0_12 = arith.constant 0 : index
    %28 = vector.load %arg8[%c0_11, %c0_12] : memref<1x128xf32, #tpu.memory_space<vmem>>, vector<1x128xf32>
    %29 = vector.broadcast %28 : vector<1x128xf32> to vector<64x128xf32>
    %30 = arith.addf %27, %29 : vector<64x128xf32>
    %cst_13 = arith.constant 0.000000e+00 : f32
    %31 = vector.broadcast %cst_13 : f32 to vector<64x128xf32>
    %32 = arith.maximumf %30, %31 : vector<64x128xf32>
    %cst_14 = arith.constant 0.000000e+00 : f32
    %33 = vector.shape_cast %2 : vector<64x1xi1> to vector<64x1xi1>
    %34 = vector.broadcast %33 : vector<64x1xi1> to vector<64x128xi1>
    %35 = vector.broadcast %cst_14 : f32 to vector<64x128xf32>
    %36 = arith.select %34, %32, %35 : vector<64x128xi1>, vector<64x128xf32>
    %37 = arith.truncf %36 : vector<64x128xf32> to vector<64x128xbf16>
    %c0_15 = arith.constant 0 : index
    %c0_16 = arith.constant 0 : index
    %38 = vector.load %arg2[%c0_15, %c0_16] : memref<128x128xbf16, #tpu.memory_space<vmem>>, vector<128x128xbf16>
    %cst_17 = arith.constant dense<0.000000e+00> : vector<64x128xf32>
    %39 = tpu.matmul %37, %38, %cst_17 {dimension_numbers = #tpu.dot_dimension_numbers<[1], [0], [0], [1], [0, 0, 1, 1], [], []>} : vector<64x128xbf16>, vector<128x128xbf16>, vector<64x128xf32> -> vector<64x128xf32>
    %cst_18 = arith.constant dense<0.000000e+00> : vector<128xf32>
    %40 = vector.multi_reduction <add>, %39, %cst_18 [0] : vector<64x128xf32> to vector<128xf32>
    %41 = vector.shape_cast %40 : vector<128xf32> to vector<1x128xf32>
    %cst_19 = arith.constant 0.0166666675 : f32
    %42 = vector.broadcast %cst_19 : f32 to vector<1x128xf32>
    %43 = arith.mulf %41, %42 : vector<1x128xf32>
    %44 = vector.broadcast %43 : vector<1x128xf32> to vector<64x128xf32>
    %45 = arith.subf %39, %44 : vector<64x128xf32>
    %cst_20 = arith.constant 0.000000e+00 : f32
    %46 = vector.shape_cast %2 : vector<64x1xi1> to vector<64x1xi1>
    %47 = vector.broadcast %46 : vector<64x1xi1> to vector<64x128xi1>
    %48 = vector.broadcast %cst_20 : f32 to vector<64x128xf32>
    %49 = arith.select %47, %45, %48 : vector<64x128xi1>, vector<64x128xf32>
    %50 = arith.mulf %49, %49 : vector<64x128xf32>
    %cst_21 = arith.constant dense<0.000000e+00> : vector<128xf32>
    %51 = vector.multi_reduction <add>, %50, %cst_21 [0] : vector<64x128xf32> to vector<128xf32>
    %52 = vector.shape_cast %51 : vector<128xf32> to vector<1x128xf32>
    %cst_22 = arith.constant 0.0166666675 : f32
    %53 = vector.broadcast %cst_22 : f32 to vector<1x128xf32>
    %54 = arith.mulf %52, %53 : vector<1x128xf32>
    %c0_23 = arith.constant 0 : index
    %c0_24 = arith.constant 0 : index
    %55 = vector.load %arg9[%c0_23, %c0_24] : memref<1x128xf32, #tpu.memory_space<vmem>>, vector<1x128xf32>
    %cst_25 = arith.constant 9.99999974E-6 : f32
    %56 = vector.broadcast %cst_25 : f32 to vector<1x128xf32>
    %57 = arith.addf %54, %56 : vector<1x128xf32>
    %58 = math.rsqrt %57 : vector<1x128xf32>
    %59 = arith.mulf %55, %58 : vector<1x128xf32>
    %60 = vector.broadcast %59 : vector<1x128xf32> to vector<64x128xf32>
    %61 = arith.mulf %49, %60 : vector<64x128xf32>
    %c0_26 = arith.constant 0 : index
    %c0_27 = arith.constant 0 : index
    %62 = vector.load %arg10[%c0_26, %c0_27] : memref<1x128xf32, #tpu.memory_space<vmem>>, vector<1x128xf32>
    %63 = vector.broadcast %62 : vector<1x128xf32> to vector<64x128xf32>
    %64 = arith.addf %61, %63 : vector<64x128xf32>
    %cst_28 = arith.constant 0.000000e+00 : f32
    %65 = vector.broadcast %cst_28 : f32 to vector<64x128xf32>
    %66 = arith.maximumf %64, %65 : vector<64x128xf32>
    %cst_29 = arith.constant 0.000000e+00 : f32
    %67 = vector.shape_cast %2 : vector<64x1xi1> to vector<64x1xi1>
    %68 = vector.broadcast %67 : vector<64x1xi1> to vector<64x128xi1>
    %69 = vector.broadcast %cst_29 : f32 to vector<64x128xf32>
    %70 = arith.select %68, %66, %69 : vector<64x128xi1>, vector<64x128xf32>
    %71 = arith.truncf %70 : vector<64x128xf32> to vector<64x128xbf16>
    %c0_30 = arith.constant 0 : index
    %c0_31 = arith.constant 0 : index
    %72 = vector.load %arg3[%c0_30, %c0_31] : memref<128x128xbf16, #tpu.memory_space<vmem>>, vector<128x128xbf16>
    %cst_32 = arith.constant dense<0.000000e+00> : vector<64x128xf32>
    %73 = tpu.matmul %71, %72, %cst_32 {dimension_numbers = #tpu.dot_dimension_numbers<[1], [0], [0], [1], [0, 0, 1, 1], [], []>} : vector<64x128xbf16>, vector<128x128xbf16>, vector<64x128xf32> -> vector<64x128xf32>
    %cst_33 = arith.constant dense<0.000000e+00> : vector<128xf32>
    %74 = vector.multi_reduction <add>, %73, %cst_33 [0] : vector<64x128xf32> to vector<128xf32>
    %75 = vector.shape_cast %74 : vector<128xf32> to vector<1x128xf32>
    %cst_34 = arith.constant 0.0166666675 : f32
    %76 = vector.broadcast %cst_34 : f32 to vector<1x128xf32>
    %77 = arith.mulf %75, %76 : vector<1x128xf32>
    %78 = vector.broadcast %77 : vector<1x128xf32> to vector<64x128xf32>
    %79 = arith.subf %73, %78 : vector<64x128xf32>
    %cst_35 = arith.constant 0.000000e+00 : f32
    %80 = vector.shape_cast %2 : vector<64x1xi1> to vector<64x1xi1>
    %81 = vector.broadcast %80 : vector<64x1xi1> to vector<64x128xi1>
    %82 = vector.broadcast %cst_35 : f32 to vector<64x128xf32>
    %83 = arith.select %81, %79, %82 : vector<64x128xi1>, vector<64x128xf32>
    %84 = arith.mulf %83, %83 : vector<64x128xf32>
    %cst_36 = arith.constant dense<0.000000e+00> : vector<128xf32>
    %85 = vector.multi_reduction <add>, %84, %cst_36 [0] : vector<64x128xf32> to vector<128xf32>
    %86 = vector.shape_cast %85 : vector<128xf32> to vector<1x128xf32>
    %cst_37 = arith.constant 0.0166666675 : f32
    %87 = vector.broadcast %cst_37 : f32 to vector<1x128xf32>
    %88 = arith.mulf %86, %87 : vector<1x128xf32>
    %c0_38 = arith.constant 0 : index
    %c0_39 = arith.constant 0 : index
    %89 = vector.load %arg11[%c0_38, %c0_39] : memref<1x128xf32, #tpu.memory_space<vmem>>, vector<1x128xf32>
    %cst_40 = arith.constant 9.99999974E-6 : f32
    %90 = vector.broadcast %cst_40 : f32 to vector<1x128xf32>
    %91 = arith.addf %88, %90 : vector<1x128xf32>
    %92 = math.rsqrt %91 : vector<1x128xf32>
    %93 = arith.mulf %89, %92 : vector<1x128xf32>
    %94 = vector.broadcast %93 : vector<1x128xf32> to vector<64x128xf32>
    %95 = arith.mulf %83, %94 : vector<64x128xf32>
    %c0_41 = arith.constant 0 : index
    %c0_42 = arith.constant 0 : index
    %96 = vector.load %arg12[%c0_41, %c0_42] : memref<1x128xf32, #tpu.memory_space<vmem>>, vector<1x128xf32>
    %97 = vector.broadcast %96 : vector<1x128xf32> to vector<64x128xf32>
    %98 = arith.addf %95, %97 : vector<64x128xf32>
    %cst_43 = arith.constant 0.000000e+00 : f32
    %99 = vector.broadcast %cst_43 : f32 to vector<64x128xf32>
    %100 = arith.maximumf %98, %99 : vector<64x128xf32>
    %cst_44 = arith.constant 0.000000e+00 : f32
    %101 = vector.shape_cast %2 : vector<64x1xi1> to vector<64x1xi1>
    %102 = vector.broadcast %101 : vector<64x1xi1> to vector<64x128xi1>
    %103 = vector.broadcast %cst_44 : f32 to vector<64x128xf32>
    %104 = arith.select %102, %100, %103 : vector<64x128xi1>, vector<64x128xf32>
    %105 = arith.truncf %104 : vector<64x128xf32> to vector<64x128xbf16>
    %c0_45 = arith.constant 0 : index
    %c0_46 = arith.constant 0 : index
    %106 = vector.load %arg4[%c0_45, %c0_46] : memref<128x128xbf16, #tpu.memory_space<vmem>>, vector<128x128xbf16>
    %cst_47 = arith.constant dense<0.000000e+00> : vector<64x128xf32>
    %107 = tpu.matmul %105, %106, %cst_47 {dimension_numbers = #tpu.dot_dimension_numbers<[1], [0], [0], [1], [0, 0, 1, 1], [], []>} : vector<64x128xbf16>, vector<128x128xbf16>, vector<64x128xf32> -> vector<64x128xf32>
    %cst_48 = arith.constant dense<0.000000e+00> : vector<128xf32>
    %108 = vector.multi_reduction <add>, %107, %cst_48 [0] : vector<64x128xf32> to vector<128xf32>
    %109 = vector.shape_cast %108 : vector<128xf32> to vector<1x128xf32>
    %cst_49 = arith.constant 0.0166666675 : f32
    %110 = vector.broadcast %cst_49 : f32 to vector<1x128xf32>
    %111 = arith.mulf %109, %110 : vector<1x128xf32>
    %112 = vector.broadcast %111 : vector<1x128xf32> to vector<64x128xf32>
    %113 = arith.subf %107, %112 : vector<64x128xf32>
    %cst_50 = arith.constant 0.000000e+00 : f32
    %114 = vector.shape_cast %2 : vector<64x1xi1> to vector<64x1xi1>
    %115 = vector.broadcast %114 : vector<64x1xi1> to vector<64x128xi1>
    %116 = vector.broadcast %cst_50 : f32 to vector<64x128xf32>
    %117 = arith.select %115, %113, %116 : vector<64x128xi1>, vector<64x128xf32>
    %118 = arith.mulf %117, %117 : vector<64x128xf32>
    %cst_51 = arith.constant dense<0.000000e+00> : vector<128xf32>
    %119 = vector.multi_reduction <add>, %118, %cst_51 [0] : vector<64x128xf32> to vector<128xf32>
    %120 = vector.shape_cast %119 : vector<128xf32> to vector<1x128xf32>
    %cst_52 = arith.constant 0.0166666675 : f32
    %121 = vector.broadcast %cst_52 : f32 to vector<1x128xf32>
    %122 = arith.mulf %120, %121 : vector<1x128xf32>
    %c0_53 = arith.constant 0 : index
    %c0_54 = arith.constant 0 : index
    %123 = vector.load %arg13[%c0_53, %c0_54] : memref<1x128xf32, #tpu.memory_space<vmem>>, vector<1x128xf32>
    %cst_55 = arith.constant 9.99999974E-6 : f32
    %124 = vector.broadcast %cst_55 : f32 to vector<1x128xf32>
    %125 = arith.addf %122, %124 : vector<1x128xf32>
    %126 = math.rsqrt %125 : vector<1x128xf32>
    %127 = arith.mulf %123, %126 : vector<1x128xf32>
    %128 = vector.broadcast %127 : vector<1x128xf32> to vector<64x128xf32>
    %129 = arith.mulf %117, %128 : vector<64x128xf32>
    %c0_56 = arith.constant 0 : index
    %c0_57 = arith.constant 0 : index
    %130 = vector.load %arg14[%c0_56, %c0_57] : memref<1x128xf32, #tpu.memory_space<vmem>>, vector<1x128xf32>
    %131 = vector.broadcast %130 : vector<1x128xf32> to vector<64x128xf32>
    %132 = arith.addf %129, %131 : vector<64x128xf32>
    %cst_58 = arith.constant 0.000000e+00 : f32
    %133 = vector.broadcast %cst_58 : f32 to vector<64x128xf32>
    %134 = arith.maximumf %132, %133 : vector<64x128xf32>
    %cst_59 = arith.constant 0.000000e+00 : f32
    %135 = vector.shape_cast %2 : vector<64x1xi1> to vector<64x1xi1>
    %136 = vector.broadcast %135 : vector<64x1xi1> to vector<64x128xi1>
    %137 = vector.broadcast %cst_59 : f32 to vector<64x128xf32>
    %138 = arith.select %136, %134, %137 : vector<64x128xi1>, vector<64x128xf32>
    %139 = arith.truncf %138 : vector<64x128xf32> to vector<64x128xbf16>
    %c0_60 = arith.constant 0 : index
    %c0_61 = arith.constant 0 : index
    %140 = vector.load %arg5[%c0_60, %c0_61] : memref<128x128xbf16, #tpu.memory_space<vmem>>, vector<128x128xbf16>
    %cst_62 = arith.constant dense<0.000000e+00> : vector<64x128xf32>
    %141 = tpu.matmul %139, %140, %cst_62 {dimension_numbers = #tpu.dot_dimension_numbers<[1], [0], [0], [1], [0, 0, 1, 1], [], []>} : vector<64x128xbf16>, vector<128x128xbf16>, vector<64x128xf32> -> vector<64x128xf32>
    %c0_63 = arith.constant 0 : index
    %c0_64 = arith.constant 0 : index
    %142 = vector.load %arg6[%c0_63, %c0_64] : memref<1x128xf32, #tpu.memory_space<vmem>>, vector<1x128xf32>
    %143 = vector.broadcast %142 : vector<1x128xf32> to vector<64x128xf32>
    %144 = arith.addf %141, %143 : vector<64x128xf32>
    %cst_65 = arith.constant 2.000000e+01 : f32
    %145 = vector.broadcast %cst_65 : f32 to vector<64x128xf32>
    %146 = arith.minimumf %144, %145 : vector<64x128xf32>
    %cst_66 = arith.constant 2.000000e+01 : f32
    %147 = vector.broadcast %cst_66 : f32 to vector<64x128xf32>
    %148 = arith.cmpf ogt, %144, %147 : vector<64x128xf32>
    %149 = math.exp %146 : vector<64x128xf32>
    %150 = math.log1p %149 : vector<64x128xf32>
    %151 = arith.select %148, %144, %150 : vector<64x128xi1>, vector<64x128xf32>
    %c0_67 = arith.constant 0 : index
    %c0_68 = arith.constant 0 : index
    %152 = vector.load %arg15[%c0_67, %c0_68] : memref<64x128xf32, #tpu.memory_space<vmem>>, vector<64x128xf32>
    tpu.vector_store %arg15[%c0_67, %c0_68], %151 {strides = array<i32>} : memref<64x128xf32, #tpu.memory_space<vmem>>, vector<64x128xf32>,
    return
  }
}

</mosaic_0001>

<llo_original>
// kernel: mlp_bn_forward.1
$region0: #{mlp_bn_forward.1}
  #allocation0 [shape = 'u32[]', space=smem, size = 0x4, offset = 0x4, fixed_abs, tag = 'smem constant byte address 0x4 - core index']
  #allocation1 [shape = 'u32[144,128]{1,0:T(1,128)}', space=vmem, size = 0x12000, scoped, tag = 'internal scratch']
  %s0 = inlined_call_operand.vmem [shape: bf16[64,128], index: 0, kind: input, shape index: {}]
  %s1 = inlined_call_operand.vmem [shape: bf16[128,128], index: 1, kind: input, shape index: {}]
  %s2 = inlined_call_operand.vmem [shape: bf16[128,128], index: 2, kind: input, shape index: {}]
  %s3 = inlined_call_operand.hbm [shape: bf16[128,128], index: 3, kind: input, shape index: {}]
  %s4 = inlined_call_operand.hbm [shape: bf16[128,128], index: 4, kind: input, shape index: {}]
  %s5 = inlined_call_operand.hbm [shape: bf16[128,128], index: 5, kind: input, shape index: {}]
  %s6 = inlined_call_operand.vmem [shape: f32[1,128], index: 6, kind: input, shape index: {}]
  %s7 = inlined_call_operand.vmem [shape: f32[1,128], index: 7, kind: input, shape index: {}]
  %s8 = inlined_call_operand.vmem [shape: f32[1,128], index: 8, kind: input, shape index: {}]
  %s9 = inlined_call_operand.vmem [shape: f32[1,128], index: 9, kind: input, shape index: {}]
  %s10 = inlined_call_operand.vmem [shape: f32[1,128], index: 10, kind: input, shape index: {}]
  %s11 = inlined_call_operand.vmem [shape: f32[1,128], index: 11, kind: input, shape index: {}]
  %s12 = inlined_call_operand.vmem [shape: f32[1,128], index: 12, kind: input, shape index: {}]
  %s13 = inlined_call_operand.vmem [shape: f32[1,128], index: 13, kind: input, shape index: {}]
  %s14 = inlined_call_operand.vmem [shape: f32[1,128], index: 14, kind: input, shape index: {}]
  %s15 = inlined_call_operand.vmem [shape: f32[64,128], index: 15, kind: output, shape index: {}]
  %s16 = sld [smem:[#allocation0]]
  $region82: #{mlp_bn_forward.1} parent=0
    _
  %s18 = ssub.s32 1, %s16
  %s19 = scalar_select 0, %s18, %s16
  $region1: #{mlp_bn_forward.1} parent=0
    #allocation2 [shape = 'u8[32768]{0}', space=vmem, size = 0x8000, scoped, tag = 'input window, operand 3, single buffered']
    #allocation3 [shape = 's32[1]{0}', space=sflag, size = 0x4, scoped, tag = 'scoped memory for mlp_bn_forward.1']
    #allocation4 [shape = 'u8[32768]{0}', space=vmem, size = 0x8000, scoped, tag = 'input window, operand 4, single buffered']
    #allocation5 [shape = 's32[1]{0}', space=sflag, size = 0x4, scoped, tag = 'scoped memory for mlp_bn_forward.1']
    #allocation6 [shape = 'u8[32768]{0}', space=vmem, size = 0x8000, scoped, tag = 'input window, operand 5, single buffered']
    %20 = vsyncpa [#allocation3], 0
    %21 = vsyncpa [#allocation5], 0
    // Predicated region
    $region2: #{mlp_bn_forward.1} parent=1 // pred_check
      _
    $region3: #{mlp_bn_forward.1} parent=1 // pred_check_branch
      %23 = sbr.rel (0) target = $region5
    $region4: #{mlp_bn_forward.1} parent=1 // pred_region
      _
    $region5: #{mlp_bn_forward.1} parent=1 // pred_fallthru
      _
    // Predicated region
    $region6: #{mlp_bn_forward.1} parent=1 // pred_check
      _
    $region7: #{mlp_bn_forward.1} parent=1 // pred_check_branch
      %25 = sbr.rel (0) target = $region9
    $region8: #{mlp_bn_forward.1} parent=1 // pred_region
      _
    $region9: #{mlp_bn_forward.1} parent=1 // pred_fallthru
      _
    // Predicated region
    $region10: #{mlp_bn_forward.1} parent=1 // pred_check
      _
    $region11: #{mlp_bn_forward.1} parent=1 // pred_check_branch
      %27 = sbr.rel (0) target = $region13
    $region12: #{mlp_bn_forward.1} parent=1 // pred_region
      _
    $region13: #{mlp_bn_forward.1} parent=1 // pred_fallthru
      _
    // Predicated region
    $region14: #{mlp_bn_forward.1} parent=1 // pred_check
      _
    $region15: #{mlp_bn_forward.1} parent=1 // pred_check_branch
      %29 = sbr.rel (0) target = $region17
    $region16: #{mlp_bn_forward.1} parent=1 // pred_region
      %s31 = ssub.s32 1024, 1024
      %32 = vsyncadd [#allocation3], %s31
      %s33 = sshll.u32 [#allocation2], 4
      %s34 = int_to_ptr.vmem [resolvable:$true] %s33
      %39 = dma.hbm_to_vmem [thread:$0]  %s3, 1024, %s34, [#allocation3], 64, 64, 4
    $region17: #{mlp_bn_forward.1} parent=1 // pred_fallthru
      _
    // Predicated region
    $region18: #{mlp_bn_forward.1} parent=1 // pred_check
      _
    $region19: #{mlp_bn_forward.1} parent=1 // pred_check_branch
      %41 = sbr.rel (0) target = $region21
    $region20: #{mlp_bn_forward.1} parent=1 // pred_region
      %s43 = ssub.s32 1024, 1024
      %44 = vsyncadd [#allocation5], %s43
      %s45 = sshll.u32 [#allocation4], 4
      %s46 = int_to_ptr.vmem [resolvable:$true] %s45
      %51 = dma.hbm_to_vmem [thread:$0]  %s4, 1024, %s46, [#allocation5], 64, 64, 4
    $region21: #{mlp_bn_forward.1} parent=1 // pred_fallthru
      _
    // Predicated region
    $region22: #{mlp_bn_forward.1} parent=1 // pred_check
      _
    $region23: #{mlp_bn_forward.1} parent=1 // pred_check_branch
      %53 = sbr.rel (0) target = $region25
    $region24: #{mlp_bn_forward.1} parent=1 // pred_region
      %s55 = ssub.s32 1024, 1024
      %56 = vsyncadd [#allocation5], %s55
      %s57 = sshll.u32 [#allocation6], 4
      %s58 = int_to_ptr.vmem [resolvable:$true] %s57
      %63 = dma.hbm_to_vmem [thread:$0]  %s5, 1024, %s58, [#allocation5], 64, 64, 4
    $region25: #{mlp_bn_forward.1} parent=1 // pred_fallthru
      _
    // Predicated region
    $region26: #{mlp_bn_forward.1} parent=1 // pred_check
      _
    $region27: #{mlp_bn_forward.1} parent=1 // pred_check_branch
      %65 = sbr.rel (0) target = $region29
    $region28: #{mlp_bn_forward.1} parent=1 // pred_region
      _
    $region29: #{mlp_bn_forward.1} parent=1 // pred_fallthru
      _
    // Predicated region
    $region30: #{mlp_bn_forward.1} parent=1 // pred_check
      _
    $region31: #{mlp_bn_forward.1} parent=1 // pred_check_branch
      %67 = sbr.rel (0) target = $region33
    $region32: #{mlp_bn_forward.1} parent=1 // pred_region
      _
    $region33: #{mlp_bn_forward.1} parent=1 // pred_fallthru
      _
    // Predicated region
    $region34: #{mlp_bn_forward.1} parent=1 // pred_check
      _
    $region35: #{mlp_bn_forward.1} parent=1 // pred_check_branch
      %69 = sbr.rel (0) target = $region37
    $region36: #{mlp_bn_forward.1} parent=1 // pred_region
      _
    $region37: #{mlp_bn_forward.1} parent=1 // pred_fallthru
      _
    // Predicated region
    $region38: #{mlp_bn_forward.1} parent=1 // pred_check
      _
    $region39: #{mlp_bn_forward.1} parent=1 // pred_check_branch
      %71 = sbr.rel (0) target = $region41
    $region40: #{mlp_bn_forward.1} parent=1 // pred_region
      _
    $region41: #{mlp_bn_forward.1} parent=1 // pred_fallthru
      _
    // Predicated region
    $region42: #{mlp_bn_forward.1} parent=1 // pred_check
      _
    $region43: #{mlp_bn_forward.1} parent=1 // pred_check_branch
      %73 = sbr.rel (0) target = $region45
    $region44: #{mlp_bn_forward.1} parent=1 // pred_region
      _
    $region45: #{mlp_bn_forward.1} parent=1 // pred_fallthru
      _
    // Predicated region
    $region46: #{mlp_bn_forward.1} parent=1 // pred_check
      _
    $region47: #{mlp_bn_forward.1} parent=1 // pred_check_branch
      %75 = sbr.rel (0) target = $region49
    $region48: #{mlp_bn_forward.1} parent=1 // pred_region
      _
    $region49: #{mlp_bn_forward.1} parent=1 // pred_fallthru
      _
    // Predicated region
    $region50: #{mlp_bn_forward.1} parent=1 // pred_check
      _
    $region51: #{mlp_bn_forward.1} parent=1 // pred_check_branch
      %77 = sbr.rel (0) target = $region53
    $region52: #{mlp_bn_forward.1} parent=1 // pred_region
      _
    $region53: #{mlp_bn_forward.1} parent=1 // pred_fallthru
      _
    // Predicated region
    $region54: #{mlp_bn_forward.1} parent=1 // pred_check
      _
    $region55: #{mlp_bn_forward.1} parent=1 // pred_check_branch
      %79 = sbr.rel (0) target = $region57
    $region56: #{mlp_bn_forward.1} parent=1 // pred_region
      _
    $region57: #{mlp_bn_forward.1} parent=1 // pred_fallthru
      _
    // Predicated region
    $region58: #{mlp_bn_forward.1} parent=1 // pred_check
      _
    $region59: #{mlp_bn_forward.1} parent=1 // pred_check_branch
      %81 = sbr.rel (0) target = $region61
    $region60: #{mlp_bn_forward.1} parent=1 // pred_region
      _
    $region61: #{mlp_bn_forward.1} parent=1 // pred_fallthru
      _
    // Predicated region
    $region62: #{mlp_bn_forward.1} parent=1 // pred_check
      _
    $region63: #{mlp_bn_forward.1} parent=1 // pred_check_branch
      %83 = sbr.rel (0) target = $region65
    $region64: #{mlp_bn_forward.1} parent=1 // pred_region
      %84 = dma.done [#allocation3], 1024
    $region65: #{mlp_bn_forward.1} parent=1 // pred_fallthru
      _
    // Predicated region
    $region66: #{mlp_bn_forward.1} parent=1 // pred_check
      _
    $region67: #{mlp_bn_forward.1} parent=1 // pred_check_branch
      %86 = sbr.rel (0) target = $region69
    $region68: #{mlp_bn_forward.1} parent=1 // pred_region
      %87 = dma.done [#allocation5], 1024
    $region69: #{mlp_bn_forward.1} parent=1 // pred_fallthru
      _
    // Predicated region
    $region70: #{mlp_bn_forward.1} parent=1 // pred_check
      _
    $region71: #{mlp_bn_forward.1} parent=1 // pred_check_branch
      %89 = sbr.rel (0) target = $region73
    $region72: #{mlp_bn_forward.1} parent=1 // pred_region
      %90 = dma.done [#allocation5], 1024
    $region73: #{mlp_bn_forward.1} parent=1 // pred_fallthru
      _
    %v92 = vlaneseq
    %v93 = vshrl.u32 %v92, 7
    %v94 = vadd.s32 %v93, 8
    %v95 = vadd.s32 %v93, 16
    %v96 = vadd.s32 %v93, 24
    %v97 = vadd.s32 %v93, 32
    %v98 = vadd.s32 %v93, 40
    %v99 = vadd.s32 %v93, 48
    %v100 = vadd.s32 %v93, 56
    %vm101 = vcmp.lt.s32.totalorder %v93, 60
    %vm102 = vcmp.lt.s32.totalorder %v94, 60
    %vm103 = vcmp.lt.s32.totalorder %v95, 60
    %vm104 = vcmp.lt.s32.totalorder %v96, 60
    %vm105 = vcmp.lt.s32.totalorder %v97, 60
    %vm106 = vcmp.lt.s32.totalorder %v98, 60
    %vm107 = vcmp.lt.s32.totalorder %v99, 60
    %vm108 = vcmp.lt.s32.totalorder %v100, 60
    %v109 = vld [vmem:[%s0] sm:$0xf]
    %v110 = vld [vmem:[%s0 + $0x4] sm:$0xf]
    %v111 = vld [vmem:[%s0 + $0x8] sm:$0xf]
    %v112 = vld [vmem:[%s0 + $0xc] sm:$0xf]
    %v113 = vld [vmem:[%s0 + $0x10] sm:$0xf]
    %v114 = vld [vmem:[%s0 + $0x14] sm:$0xf]
    %v115 = vld [vmem:[%s0 + $0x18] sm:$0xf]
    %v116 = vld [vmem:[%s0 + $0x1c] sm:$0xf]
    %v117 = vld [vmem:[%s1] sm:$0xf]
    %v118 = vld [vmem:[%s1 + $0x4] sm:$0xf]
    %v119 = vld [vmem:[%s1 + $0x8] sm:$0xf]
    %v120 = vld [vmem:[%s1 + $0xc] sm:$0xf]
    %v121 = vld [vmem:[%s1 + $0x10] sm:$0xf]
    %v122 = vld [vmem:[%s1 + $0x14] sm:$0xf]
    %v123 = vld [vmem:[%s1 + $0x18] sm:$0xf]
    %v124 = vld [vmem:[%s1 + $0x1c] sm:$0xf]
    %v125 = vld [vmem:[%s1 + $0x20] sm:$0xf]
    %v126 = vld [vmem:[%s1 + $0x24] sm:$0xf]
    %v127 = vld [vmem:[%s1 + $0x28] sm:$0xf]
    %v128 = vld [vmem:[%s1 + $0x2c] sm:$0xf]
    %v129 = vld [vmem:[%s1 + $0x30] sm:$0xf]
    %v130 = vld [vmem:[%s1 + $0x34] sm:$0xf]
    %v131 = vld [vmem:[%s1 + $0x38] sm:$0xf]
    %v132 = vld [vmem:[%s1 + $0x3c] sm:$0xf]
    %v141 = vunpack.c.l.b16 %v109
    %v142 = vunpack.c.l.b16 %v110
    %v143 = vunpack.c.l.b16 %v111
    %v144 = vunpack.c.l.b16 %v112
    %v145 = vunpack.c.l.b16 %v113
    %v146 = vunpack.c.l.b16 %v114
    %v147 = vunpack.c.l.b16 %v115
    %v148 = vunpack.c.l.b16 %v116
    %v149 = vpack.c.b16 %v142, %v141
    %v150 = vpack.c.b16 %v144, %v143
    %v151 = vpack.c.b16 %v146, %v145
    %v152 = vpack.c.b16 %v148, %v147
    %v173 = vunpack.c.l.b16 %v117
    %v174 = vunpack.c.l.b16 %v118
    %v175 = vunpack.c.l.b16 %v119
    %v176 = vunpack.c.l.b16 %v120
    %v177 = vunpack.c.l.b16 %v121
    %v178 = vunpack.c.l.b16 %v122
    %v179 = vunpack.c.l.b16 %v123
    %v180 = vunpack.c.l.b16 %v124
    %v181 = vunpack.c.l.b16 %v125
    %v182 = vunpack.c.l.b16 %v126
    %v183 = vunpack.c.l.b16 %v127
    %v184 = vunpack.c.l.b16 %v128
    %v185 = vunpack.c.l.b16 %v129
    %v186 = vunpack.c.l.b16 %v130
    %v187 = vunpack.c.l.b16 %v131
    %v188 = vunpack.c.l.b16 %v132
    %v189 = vpack.c.b16 %v174, %v173
    %v190 = vpack.c.b16 %v176, %v175
    %v191 = vpack.c.b16 %v178, %v177
    %v192 = vpack.c.b16 %v180, %v179
    %v193 = vpack.c.b16 %v182, %v181
    %v194 = vpack.c.b16 %v184, %v183
    %v195 = vpack.c.b16 %v186, %v185
    %v196 = vpack.c.b16 %v188, %v187
    %205 = vmatprep.subr.bf16.mxu0 0
    %206 = vmatpush1.bf16.msra.mxu0 %v196
    %207 = vmatprep.subr.bf16.mxu0 0
    %208 = vmatpush1.bf16.msra.mxu0 %v195
    %209 = vmatprep.subr.bf16.mxu0 0
    %210 = vmatpush1.bf16.msra.mxu0 %v194
    %211 = vmatprep.subr.bf16.mxu0 0
    %212 = vmatpush1.bf16.msra.mxu0 %v193
    %213 = vmatprep.subr.bf16.mxu0 0
    %214 = vmatpush1.bf16.msra.mxu0 %v192
    %215 = vmatprep.subr.bf16.mxu0 0
    %216 = vmatpush1.bf16.msra.mxu0 %v191
    %217 = vmatprep.subr.bf16.mxu0 0
    %218 = vmatpush1.bf16.msra.mxu0 %v190
    %219 = vmatprep.subr.bf16.mxu0 0
    %220 = vmatpush1.bf16.msra.mxu0 %v189
    %221 = vmatprep.subr.bf16.mxu0 0
    %222 = vmatpush2.bf16.msra.mxu0 0
    %223 = vmatprep.subr.bf16.mxu0 0
    %224 = vmatpush2.bf16.msra.mxu0 0
    %225 = vmatprep.subr.bf16.mxu0 0
    %226 = vmatpush2.bf16.msra.mxu0 0
    %227 = vmatprep.subr.bf16.mxu0 0
    %228 = vmatpush2.bf16.msra.mxu0 0
    %229 = vmatprep.subr.bf16.mxu0 0
    %230 = vmatpush2.bf16.msra.mxu0 0
    %231 = vmatprep.subr.bf16.mxu0 0
    %232 = vmatpush2.bf16.msra.mxu0 0
    %233 = vmatprep.subr.bf16.mxu0 0
    %234 = vmatpush2.bf16.msra.mxu0 0
    %235 = vmatprep.subr.bf16.mxu0 0
    %236 = vmatpush2.bf16.msra.mxu0 0
    %237 = vmatprep.mubr.bf16.mxu0 0
    %238 = vmatmul.mubr.bf16.gmra.mxu0 %v149
    %v239 = vpop.f32.mrf.mxu0
    %v240 = vadd.f32 0.0, %v239
    %v241 = vpop.f32.mrf.mxu0
    %v242 = vpop.f32.mrf.mxu0
    %v243 = vadd.f32 0.0, %v242
    %v244 = vpop.f32.mrf.mxu0
    %245 = vmatprep.mubr.bf16.mxu0 0
    %246 = vmatmul.mubr.bf16.gmra.mxu0 %v150
    %v247 = vpop.f32.mrf.mxu0
    %v248 = vadd.f32 0.0, %v247
    %v249 = vpop.f32.mrf.mxu0
    %v250 = vpop.f32.mrf.mxu0
    %v251 = vadd.f32 0.0, %v250
    %v252 = vpop.f32.mrf.mxu0
    %253 = vmatprep.mubr.bf16.mxu0 0
    %254 = vmatmul.mubr.bf16.gmra.mxu0 %v151
    %v255 = vpop.f32.mrf.mxu0
    %v256 = vadd.f32 0.0, %v255
    %v257 = vpop.f32.mrf.mxu0
    %v258 = vpop.f32.mrf.mxu0
    %v259 = vadd.f32 0.0, %v258
    %v260 = vpop.f32.mrf.mxu0
    %261 = vmatprep.mubr.bf16.mxu0 0
    %262 = vmatmul.mubr.bf16.gmra.mxu0 %v152
    %v263 = vpop.f32.mrf.mxu0
    %v264 = vadd.f32 0.0, %v263
    %v265 = vpop.f32.mrf.mxu0
    %v266 = vpop.f32.mrf.mxu0
    %v267 = vadd.f32 0.0, %v266
    %v268 = vpop.f32.mrf.mxu0
    %269 = vdwg.mxu0
    %v270 = vadd.f32 %v240, %v243
    %v271 = vadd.f32 %v270, %v248
    %v272 = vadd.f32 %v271, %v251
    %v273 = vadd.f32 %v272, %v256
    %v274 = vadd.f32 %v273, %v259
    %v275 = vadd.f32 %v274, %v264
    %v276 = vadd.f32 %v275, %v267
    %v277 = vrot.slane %v276, 4
    %v278 = vadd.f32 %v276, %v277
    %v279 = vrot.slane %v278, 2
    %v280 = vadd.f32 %v278, %v279
    %v281 = vrot.slane %v280, 1
    %v282 = vadd.f32 %v280, %v281
    %v283 = vmul.f32 %v282, 0.016666668
    %v284 = vsub.f32 %v240, %v283
    %v285 = vsub.f32 %v243, %v283
    %v286 = vsub.f32 %v248, %v283
    %v287 = vsub.f32 %v251, %v283
    %v288 = vsub.f32 %v256, %v283
    %v289 = vsub.f32 %v259, %v283
    %v290 = vsub.f32 %v264, %v283
    %v291 = vsub.f32 %v267, %v283
    %v292 = vsel %vm101, 1, 0
    %v293 = vsel %vm102, 1, 0
    %v294 = vsel %vm103, 1, 0
    %v295 = vsel %vm104, 1, 0
    %v296 = vsel %vm105, 1, 0
    %v297 = vsel %vm106, 1, 0
    %v298 = vsel %vm107, 1, 0
    %v299 = vsel %vm108, 1, 0
    %vm300 = vcmp.eq.s32.totalorder %v292, 1
    %vm301 = vcmp.eq.s32.totalorder %v293, 1
    %vm302 = vcmp.eq.s32.totalorder %v294, 1
    %vm303 = vcmp.eq.s32.totalorder %v295, 1
    %vm304 = vcmp.eq.s32.totalorder %v296, 1
    %vm305 = vcmp.eq.s32.totalorder %v297, 1
    %vm306 = vcmp.eq.s32.totalorder %v298, 1
    %vm307 = vcmp.eq.s32.totalorder %v299, 1
    %v308 = vsel %vm300, %v284, 0.0
    %v309 = vsel %vm301, %v285, 0.0
    %v310 = vsel %vm302, %v286, 0.0
    %v311 = vsel %vm303, %v287, 0.0
    %v312 = vsel %vm304, %v288, 0.0
    %v313 = vsel %vm305, %v289, 0.0
    %v314 = vsel %vm306, %v290, 0.0
    %v315 = vsel %vm307, %v291, 0.0
    %v316 = vmul.f32 %v308, %v308
    %v317 = vmul.f32 %v309, %v309
    %v318 = vmul.f32 %v310, %v310
    %v319 = vmul.f32 %v311, %v311
    %v320 = vmul.f32 %v312, %v312
    %v321 = vmul.f32 %v313, %v313
    %v322 = vmul.f32 %v314, %v314
    %v323 = vmul.f32 %v315, %v315
    %v324 = vadd.f32 %v316, %v317
    %v325 = vadd.f32 %v324, %v318
    %v326 = vadd.f32 %v325, %v319
    %v327 = vadd.f32 %v326, %v320
    %v328 = vadd.f32 %v327, %v321
    %v329 = vadd.f32 %v328, %v322
    %v330 = vadd.f32 %v329, %v323
    %v331 = vrot.slane %v330, 4
    %v332 = vadd.f32 %v330, %v331
    %v333 = vrot.slane %v332, 2
    %v334 = vadd.f32 %v332, %v333
    %v335 = vrot.slane %v334, 1
    %v336 = vadd.f32 %v334, %v335
    %v337 = vmul.f32 %v336, 0.016666668
    %v338 = vld [vmem:[%s7] sm:$0x1]
    %v339 = vadd.f32 %v337, 1e-05
    %v340 = vrsqrt.pop %v339
    %v341 = vmul.f32 %v338, %v340
    %v343 = vlaneseq
    %v344 = vshrl.u32 %v343, 7
    %v345 = vsub.s32 0, %v344
    %v346 = vrot.slane %v341, %v345
    %v348 = vmul.f32 %v308, %v346
    %v349 = vmul.f32 %v309, %v346
    %v350 = vmul.f32 %v310, %v346
    %v351 = vmul.f32 %v311, %v346
    %v352 = vmul.f32 %v312, %v346
    %v353 = vmul.f32 %v313, %v346
    %v354 = vmul.f32 %v314, %v346
    %v355 = vmul.f32 %v315, %v346
    %v356 = vld [vmem:[%s8] sm:$0x1]
    %v358 = vlaneseq
    %v359 = vshrl.u32 %v358, 7
    %v360 = vsub.s32 0, %v359
    %v361 = vrot.slane %v356, %v360
    %v363 = vadd.f32 %v348, %v361
    %v364 = vadd.f32 %v349, %v361
    %v365 = vadd.f32 %v350, %v361
    %v366 = vadd.f32 %v351, %v361
    %v367 = vadd.f32 %v352, %v361
    %v368 = vadd.f32 %v353, %v361
    %v369 = vadd.f32 %v354, %v361
    %v370 = vadd.f32 %v355, %v361
    %v371 = vmax.f32 %v363, 0.0
    %v372 = vmax.f32 %v364, 0.0
    %v373 = vmax.f32 %v365, 0.0
    %v374 = vmax.f32 %v366, 0.0
    %v375 = vmax.f32 %v367, 0.0
    %v376 = vmax.f32 %v368, 0.0
    %v377 = vmax.f32 %v369, 0.0
    %v378 = vmax.f32 %v370, 0.0
    %v379 = vsel %vm300, %v371, 0.0
    %v380 = vsel %vm301, %v372, 0.0
    %v381 = vsel %vm302, %v373, 0.0
    %v382 = vsel %vm303, %v374, 0.0
    %v383 = vsel %vm304, %v375, 0.0
    %v384 = vsel %vm305, %v376, 0.0
    %v385 = vsel %vm306, %v377, 0.0
    %v386 = vsel %vm307, %v378, 0.0
    %v387 = vpack.c.bf16 %v380, %v379
    %v388 = vpack.c.bf16 %v382, %v381
    %v389 = vpack.c.bf16 %v384, %v383
    %v390 = vpack.c.bf16 %v386, %v385
    %v391 = vld [vmem:[%s2] sm:$0xf]
    %v392 = vld [vmem:[%s2 + $0x4] sm:$0xf]
    %v393 = vld [vmem:[%s2 + $0x8] sm:$0xf]
    %v394 = vld [vmem:[%s2 + $0xc] sm:$0xf]
    %v395 = vld [vmem:[%s2 + $0x10] sm:$0xf]
    %v396 = vld [vmem:[%s2 + $0x14] sm:$0xf]
    %v397 = vld [vmem:[%s2 + $0x18] sm:$0xf]
    %v398 = vld [vmem:[%s2 + $0x1c] sm:$0xf]
    %v399 = vld [vmem:[%s2 + $0x20] sm:$0xf]
    %v400 = vld [vmem:[%s2 + $0x24] sm:$0xf]
    %v401 = vld [vmem:[%s2 + $0x28] sm:$0xf]
    %v402 = vld [vmem:[%s2 + $0x2c] sm:$0xf]
    %v403 = vld [vmem:[%s2 + $0x30] sm:$0xf]
    %v404 = vld [vmem:[%s2 + $0x34] sm:$0xf]
    %v405 = vld [vmem:[%s2 + $0x38] sm:$0xf]
    %v406 = vld [vmem:[%s2 + $0x3c] sm:$0xf]
    %v423 = vunpack.c.l.b16 %v391
    %v424 = vunpack.c.l.b16 %v392
    %v425 = vunpack.c.l.b16 %v393
    %v426 = vunpack.c.l.b16 %v394
    %v427 = vunpack.c.l.b16 %v395
    %v428 = vunpack.c.l.b16 %v396
    %v429 = vunpack.c.l.b16 %v397
    %v430 = vunpack.c.l.b16 %v398
    %v431 = vunpack.c.l.b16 %v399
    %v432 = vunpack.c.l.b16 %v400
    %v433 = vunpack.c.l.b16 %v401
    %v434 = vunpack.c.l.b16 %v402
    %v435 = vunpack.c.l.b16 %v403
    %v436 = vunpack.c.l.b16 %v404
    %v437 = vunpack.c.l.b16 %v405
    %v438 = vunpack.c.l.b16 %v406
    %v439 = vpack.c.b16 %v424, %v423
    %v440 = vpack.c.b16 %v426, %v425
    %v441 = vpack.c.b16 %v428, %v427
    %v442 = vpack.c.b16 %v430, %v429
    %v443 = vpack.c.b16 %v432, %v431
    %v444 = vpack.c.b16 %v434, %v433
    %v445 = vpack.c.b16 %v436, %v435
    %v446 = vpack.c.b16 %v438, %v437
    %455 = vmatprep.subr.bf16.mxu0 0
    %456 = vmatpush1.bf16.msra.mxu0 %v446
    %457 = vmatprep.subr.bf16.mxu0 0
    %458 = vmatpush1.bf16.msra.mxu0 %v445
    %459 = vmatprep.subr.bf16.mxu0 0
    %460 = vmatpush1.bf16.msra.mxu0 %v444
    %461 = vmatprep.subr.bf16.mxu0 0
    %462 = vmatpush1.bf16.msra.mxu0 %v443
    %463 = vmatprep.subr.bf16.mxu0 0
    %464 = vmatpush1.bf16.msra.mxu0 %v442
    %465 = vmatprep.subr.bf16.mxu0 0
    %466 = vmatpush1.bf16.msra.mxu0 %v441
    %467 = vmatprep.subr.bf16.mxu0 0
    %468 = vmatpush1.bf16.msra.mxu0 %v440
    %469 = vmatprep.subr.bf16.mxu0 0
    %470 = vmatpush1.bf16.msra.mxu0 %v439
    %471 = vmatprep.subr.bf16.mxu0 0
    %472 = vmatpush2.bf16.msra.mxu0 0
    %473 = vmatprep.subr.bf16.mxu0 0
    %474 = vmatpush2.bf16.msra.mxu0 0
    %475 = vmatprep.subr.bf16.mxu0 0
    %476 = vmatpush2.bf16.msra.mxu0 0
    %477 = vmatprep.subr.bf16.mxu0 0
    %478 = vmatpush2.bf16.msra.mxu0 0
    %479 = vmatprep.subr.bf16.mxu0 0
    %480 = vmatpush2.bf16.msra.mxu0 0
    %481 = vmatprep.subr.bf16.mxu0 0
    %482 = vmatpush2.bf16.msra.mxu0 0
    %483 = vmatprep.subr.bf16.mxu0 0
    %484 = vmatpush2.bf16.msra.mxu0 0
    %485 = vmatprep.subr.bf16.mxu0 0
    %486 = vmatpush2.bf16.msra.mxu0 0
    %487 = vmatprep.mubr.bf16.mxu0 0
    %488 = vmatmul.mubr.bf16.gmra.mxu0 %v387
    %v489 = vpop.f32.mrf.mxu0
    %v490 = vadd.f32 0.0, %v489
    %v491 = vpop.f32.mrf.mxu0
    %v492 = vpop.f32.mrf.mxu0
    %v493 = vadd.f32 0.0, %v492
    %v494 = vpop.f32.mrf.mxu0
    %495 = vmatprep.mubr.bf16.mxu0 0
    %496 = vmatmul.mubr.bf16.gmra.mxu0 %v388
    %v497 = vpop.f32.mrf.mxu0
    %v498 = vadd.f32 0.0, %v497
    %v499 = vpop.f32.mrf.mxu0
    %v500 = vpop.f32.mrf.mxu0
    %v501 = vadd.f32 0.0, %v500
    %v502 = vpop.f32.mrf.mxu0
    %503 = vmatprep.mubr.bf16.mxu0 0
    %504 = vmatmul.mubr.bf16.gmra.mxu0 %v389
    %v505 = vpop.f32.mrf.mxu0
    %v506 = vadd.f32 0.0, %v505
    %v507 = vpop.f32.mrf.mxu0
    %v508 = vpop.f32.mrf.mxu0
    %v509 = vadd.f32 0.0, %v508
    %v510 = vpop.f32.mrf.mxu0
    %511 = vmatprep.mubr.bf16.mxu0 0
    %512 = vmatmul.mubr.bf16.gmra.mxu0 %v390
    %v513 = vpop.f32.mrf.mxu0
    %v514 = vadd.f32 0.0, %v513
    %v515 = vpop.f32.mrf.mxu0
    %v516 = vpop.f32.mrf.mxu0
    %v517 = vadd.f32 0.0, %v516
    %v518 = vpop.f32.mrf.mxu0
    %519 = vdwg.mxu0
    %v520 = vadd.f32 %v490, %v493
    %v521 = vadd.f32 %v520, %v498
    %v522 = vadd.f32 %v521, %v501
    %v523 = vadd.f32 %v522, %v506
    %v524 = vadd.f32 %v523, %v509
    %v525 = vadd.f32 %v524, %v514
    %v526 = vadd.f32 %v525, %v517
    %v527 = vrot.slane %v526, 4
    %v528 = vadd.f32 %v526, %v527
    %v529 = vrot.slane %v528, 2
    %v530 = vadd.f32 %v528, %v529
    %v531 = vrot.slane %v530, 1
    %v532 = vadd.f32 %v530, %v531
    %v533 = vmul.f32 %v532, 0.016666668
    %v534 = vsub.f32 %v490, %v533
    %v535 = vsub.f32 %v493, %v533
    %v536 = vsub.f32 %v498, %v533
    %v537 = vsub.f32 %v501, %v533
    %v538 = vsub.f32 %v506, %v533
    %v539 = vsub.f32 %v509, %v533
    %v540 = vsub.f32 %v514, %v533
    %v541 = vsub.f32 %v517, %v533
    %v542 = vsel %vm300, %v534, 0.0
    %v543 = vsel %vm301, %v535, 0.0
    %v544 = vsel %vm302, %v536, 0.0
    %v545 = vsel %vm303, %v537, 0.0
    %v546 = vsel %vm304, %v538, 0.0
    %v547 = vsel %vm305, %v539, 0.0
    %v548 = vsel %vm306, %v540, 0.0
    %v549 = vsel %vm307, %v541, 0.0
    %v550 = vmul.f32 %v542, %v542
    %v551 = vmul.f32 %v543, %v543
    %v552 = vmul.f32 %v544, %v544
    %v553 = vmul.f32 %v545, %v545
    %v554 = vmul.f32 %v546, %v546
    %v555 = vmul.f32 %v547, %v547
    %v556 = vmul.f32 %v548, %v548
    %v557 = vmul.f32 %v549, %v549
    %v558 = vadd.f32 %v550, %v551
    %v559 = vadd.f32 %v558, %v552
    %v560 = vadd.f32 %v559, %v553
    %v561 = vadd.f32 %v560, %v554
    %v562 = vadd.f32 %v561, %v555
    %v563 = vadd.f32 %v562, %v556
    %v564 = vadd.f32 %v563, %v557
    %v565 = vrot.slane %v564, 4
    %v566 = vadd.f32 %v564, %v565
    %v567 = vrot.slane %v566, 2
    %v568 = vadd.f32 %v566, %v567
    %v569 = vrot.slane %v568, 1
    %v570 = vadd.f32 %v568, %v569
    %v571 = vmul.f32 %v570, 0.016666668
    %v572 = vld [vmem:[%s9] sm:$0x1]
    %v573 = vadd.f32 %v571, 1e-05
    %v574 = vrsqrt.pop %v573
    %v575 = vmul.f32 %v572, %v574
    %v577 = vlaneseq
    %v578 = vshrl.u32 %v577, 7
    %v579 = vsub.s32 0, %v578
    %v580 = vrot.slane %v575, %v579
    %v582 = vmul.f32 %v542, %v580
    %v583 = vmul.f32 %v543, %v580
    %v584 = vmul.f32 %v544, %v580
    %v585 = vmul.f32 %v545, %v580
    %v586 = vmul.f32 %v546, %v580
    %v587 = vmul.f32 %v547, %v580
    %v588 = vmul.f32 %v548, %v580
    %v589 = vmul.f32 %v549, %v580
    %v590 = vld [vmem:[%s10] sm:$0x1]
    %v592 = vlaneseq
    %v593 = vshrl.u32 %v592, 7
    %v594 = vsub.s32 0, %v593
    %v595 = vrot.slane %v590, %v594
    %v597 = vadd.f32 %v582, %v595
    %v598 = vadd.f32 %v583, %v595
    %v599 = vadd.f32 %v584, %v595
    %v600 = vadd.f32 %v585, %v595
    %v601 = vadd.f32 %v586, %v595
    %v602 = vadd.f32 %v587, %v595
    %v603 = vadd.f32 %v588, %v595
    %v604 = vadd.f32 %v589, %v595
    %v605 = vmax.f32 %v597, 0.0
    %v606 = vmax.f32 %v598, 0.0
    %v607 = vmax.f32 %v599, 0.0
    %v608 = vmax.f32 %v600, 0.0
    %v609 = vmax.f32 %v601, 0.0
    %v610 = vmax.f32 %v602, 0.0
    %v611 = vmax.f32 %v603, 0.0
    %v612 = vmax.f32 %v604, 0.0
    %v613 = vsel %vm300, %v605, 0.0
    %v614 = vsel %vm301, %v606, 0.0
    %v615 = vsel %vm302, %v607, 0.0
    %v616 = vsel %vm303, %v608, 0.0
    %v617 = vsel %vm304, %v609, 0.0
    %v618 = vsel %vm305, %v610, 0.0
    %v619 = vsel %vm306, %v611, 0.0
    %v620 = vsel %vm307, %v612, 0.0
    %v621 = vpack.c.bf16 %v614, %v613
    %v622 = vpack.c.bf16 %v616, %v615
    %v623 = vpack.c.bf16 %v618, %v617
    %v624 = vpack.c.bf16 %v620, %v619
    %v625 = vld [vmem:[#allocation2] sm:$0xf]
    %v626 = vld [vmem:[#allocation2 + $0x4] sm:$0xf]
    %v627 = vld [vmem:[#allocation2 + $0x8] sm:$0xf]
    %v628 = vld [vmem:[#allocation2 + $0xc] sm:$0xf]
    %v629 = vld [vmem:[#allocation2 + $0x10] sm:$0xf]
    %v630 = vld [vmem:[#allocation2 + $0x14] sm:$0xf]
    %v631 = vld [vmem:[#allocation2 + $0x18] sm:$0xf]
    %v632 = vld [vmem:[#allocation2 + $0x1c] sm:$0xf]
    %v633 = vld [vmem:[#allocation2 + $0x20] sm:$0xf]
    %v634 = vld [vmem:[#allocation2 + $0x24] sm:$0xf]
    %v635 = vld [vmem:[#allocation2 + $0x28] sm:$0xf]
    %v636 = vld [vmem:[#allocation2 + $0x2c] sm:$0xf]
    %v637 = vld [vmem:[#allocation2 + $0x30] sm:$0xf]
    %v638 = vld [vmem:[#allocation2 + $0x34] sm:$0xf]
    %v639 = vld [vmem:[#allocation2 + $0x38] sm:$0xf]
    %v640 = vld [vmem:[#allocation2 + $0x3c] sm:$0xf]
    %v657 = vunpack.c.l.b16 %v625
    %v658 = vunpack.c.l.b16 %v626
    %v659 = vunpack.c.l.b16 %v627
    %v660 = vunpack.c.l.b16 %v628
    %v661 = vunpack.c.l.b16 %v629
    %v662 = vunpack.c.l.b16 %v630
    %v663 = vunpack.c.l.b16 %v631
    %v664 = vunpack.c.l.b16 %v632
    %v665 = vunpack.c.l.b16 %v633
    %v666 = vunpack.c.l.b16 %v634
    %v667 = vunpack.c.l.b16 %v635
    %v668 = vunpack.c.l.b16 %v636
    %v669 = vunpack.c.l.b16 %v637
    %v670 = vunpack.c.l.b16 %v638
    %v671 = vunpack.c.l.b16 %v639
    %v672 = vunpack.c.l.b16 %v640
    %v673 = vpack.c.b16 %v658, %v657
    %v674 = vpack.c.b16 %v660, %v659
    %v675 = vpack.c.b16 %v662, %v661
    %v676 = vpack.c.b16 %v664, %v663
    %v677 = vpack.c.b16 %v666, %v665
    %v678 = vpack.c.b16 %v668, %v667
    %v679 = vpack.c.b16 %v670, %v669
    %v680 = vpack.c.b16 %v672, %v671
    %689 = vmatprep.subr.bf16.mxu0 0
    %690 = vmatpush1.bf16.msra.mxu0 %v680
    %691 = vmatprep.subr.bf16.mxu0 0
    %692 = vmatpush1.bf16.msra.mxu0 %v679
    %693 = vmatprep.subr.bf16.mxu0 0
    %694 = vmatpush1.bf16.msra.mxu0 %v678
    %695 = vmatprep.subr.bf16.mxu0 0
    %696 = vmatpush1.bf16.msra.mxu0 %v677
    %697 = vmatprep.subr.bf16.mxu0 0
    %698 = vmatpush1.bf16.msra.mxu0 %v676
    %699 = vmatprep.subr.bf16.mxu0 0
    %700 = vmatpush1.bf16.msra.mxu0 %v675
    %701 = vmatprep.subr.bf16.mxu0 0
    %702 = vmatpush1.bf16.msra.mxu0 %v674
    %703 = vmatprep.subr.bf16.mxu0 0
    %704 = vmatpush1.bf16.msra.mxu0 %v673
    %705 = vmatprep.subr.bf16.mxu0 0
    %706 = vmatpush2.bf16.msra.mxu0 0
    %707 = vmatprep.subr.bf16.mxu0 0
    %708 = vmatpush2.bf16.msra.mxu0 0
    %709 = vmatprep.subr.bf16.mxu0 0
    %710 = vmatpush2.bf16.msra.mxu0 0
    %711 = vmatprep.subr.bf16.mxu0 0
    %712 = vmatpush2.bf16.msra.mxu0 0
    %713 = vmatprep.subr.bf16.mxu0 0
    %714 = vmatpush2.bf16.msra.mxu0 0
    %715 = vmatprep.subr.bf16.mxu0 0
    %716 = vmatpush2.bf16.msra.mxu0 0
    %717 = vmatprep.subr.bf16.mxu0 0
    %718 = vmatpush2.bf16.msra.mxu0 0
    %719 = vmatprep.subr.bf16.mxu0 0
    %720 = vmatpush2.bf16.msra.mxu0 0
    %721 = vmatprep.mubr.bf16.mxu0 0
    %722 = vmatmul.mubr.bf16.gmra.mxu0 %v621
    %v723 = vpop.f32.mrf.mxu0
    %v724 = vadd.f32 0.0, %v723
    %v725 = vpop.f32.mrf.mxu0
    %v726 = vpop.f32.mrf.mxu0
    %v727 = vadd.f32 0.0, %v726
    %v728 = vpop.f32.mrf.mxu0
    %729 = vmatprep.mubr.bf16.mxu0 0
    %730 = vmatmul.mubr.bf16.gmra.mxu0 %v622
    %v731 = vpop.f32.mrf.mxu0
    %v732 = vadd.f32 0.0, %v731
    %v733 = vpop.f32.mrf.mxu0
    %v734 = vpop.f32.mrf.mxu0
    %v735 = vadd.f32 0.0, %v734
    %v736 = vpop.f32.mrf.mxu0
    %737 = vmatprep.mubr.bf16.mxu0 0
    %738 = vmatmul.mubr.bf16.gmra.mxu0 %v623
    %v739 = vpop.f32.mrf.mxu0
    %v740 = vadd.f32 0.0, %v739
    %v741 = vpop.f32.mrf.mxu0
    %v742 = vpop.f32.mrf.mxu0
    %v743 = vadd.f32 0.0, %v742
    %v744 = vpop.f32.mrf.mxu0
    %745 = vmatprep.mubr.bf16.mxu0 0
    %746 = vmatmul.mubr.bf16.gmra.mxu0 %v624
    %v747 = vpop.f32.mrf.mxu0
    %v748 = vadd.f32 0.0, %v747
    %v749 = vpop.f32.mrf.mxu0
    %v750 = vpop.f32.mrf.mxu0
    %v751 = vadd.f32 0.0, %v750
    %v752 = vpop.f32.mrf.mxu0
    %753 = vdwg.mxu0
    %v754 = vadd.f32 %v724, %v727
    %v755 = vadd.f32 %v754, %v732
    %v756 = vadd.f32 %v755, %v735
    %v757 = vadd.f32 %v756, %v740
    %v758 = vadd.f32 %v757, %v743
    %v759 = vadd.f32 %v758, %v748
    %v760 = vadd.f32 %v759, %v751
    %v761 = vrot.slane %v760, 4
    %v762 = vadd.f32 %v760, %v761
    %v763 = vrot.slane %v762, 2
    %v764 = vadd.f32 %v762, %v763
    %v765 = vrot.slane %v764, 1
    %v766 = vadd.f32 %v764, %v765
    %v767 = vmul.f32 %v766, 0.016666668
    %v768 = vsub.f32 %v724, %v767
    %v769 = vsub.f32 %v727, %v767
    %v770 = vsub.f32 %v732, %v767
    %v771 = vsub.f32 %v735, %v767
    %v772 = vsub.f32 %v740, %v767
    %v773 = vsub.f32 %v743, %v767
    %v774 = vsub.f32 %v748, %v767
    %v775 = vsub.f32 %v751, %v767
    %v776 = vsel %vm300, %v768, 0.0
    %v777 = vsel %vm301, %v769, 0.0
    %v778 = vsel %vm302, %v770, 0.0
    %v779 = vsel %vm303, %v771, 0.0
    %v780 = vsel %vm304, %v772, 0.0
    %v781 = vsel %vm305, %v773, 0.0
    %v782 = vsel %vm306, %v774, 0.0
    %v783 = vsel %vm307, %v775, 0.0
    %v784 = vmul.f32 %v776, %v776
    %v785 = vmul.f32 %v777, %v777
    %v786 = vmul.f32 %v778, %v778
    %v787 = vmul.f32 %v779, %v779
    %v788 = vmul.f32 %v780, %v780
    %v789 = vmul.f32 %v781, %v781
    %v790 = vmul.f32 %v782, %v782
    %v791 = vmul.f32 %v783, %v783
    %v792 = vadd.f32 %v784, %v785
    %v793 = vadd.f32 %v792, %v786
    %v794 = vadd.f32 %v793, %v787
    %v795 = vadd.f32 %v794, %v788
    %v796 = vadd.f32 %v795, %v789
    %v797 = vadd.f32 %v796, %v790
    %v798 = vadd.f32 %v797, %v791
    %v799 = vrot.slane %v798, 4
    %v800 = vadd.f32 %v798, %v799
    %v801 = vrot.slane %v800, 2
    %v802 = vadd.f32 %v800, %v801
    %v803 = vrot.slane %v802, 1
    %v804 = vadd.f32 %v802, %v803
    %v805 = vmul.f32 %v804, 0.016666668
    %v806 = vld [vmem:[%s11] sm:$0x1]
    %v807 = vadd.f32 %v805, 1e-05
    %v808 = vrsqrt.pop %v807
    %v809 = vmul.f32 %v806, %v808
    %v811 = vlaneseq
    %v812 = vshrl.u32 %v811, 7
    %v813 = vsub.s32 0, %v812
    %v814 = vrot.slane %v809, %v813
    %v816 = vmul.f32 %v776, %v814
    %v817 = vmul.f32 %v777, %v814
    %v818 = vmul.f32 %v778, %v814
    %v819 = vmul.f32 %v779, %v814
    %v820 = vmul.f32 %v780, %v814
    %v821 = vmul.f32 %v781, %v814
    %v822 = vmul.f32 %v782, %v814
    %v823 = vmul.f32 %v783, %v814
    %v824 = vld [vmem:[%s12] sm:$0x1]
    %v826 = vlaneseq
    %v827 = vshrl.u32 %v826, 7
    %v828 = vsub.s32 0, %v827
    %v829 = vrot.slane %v824, %v828
    %v831 = vadd.f32 %v816, %v829
    %v832 = vadd.f32 %v817, %v829
    %v833 = vadd.f32 %v818, %v829
    %v834 = vadd.f32 %v819, %v829
    %v835 = vadd.f32 %v820, %v829
    %v836 = vadd.f32 %v821, %v829
    %v837 = vadd.f32 %v822, %v829
    %v838 = vadd.f32 %v823, %v829
    %v839 = vmax.f32 %v831, 0.0
    %v840 = vmax.f32 %v832, 0.0
    %v841 = vmax.f32 %v833, 0.0
    %v842 = vmax.f32 %v834, 0.0
    %v843 = vmax.f32 %v835, 0.0
    %v844 = vmax.f32 %v836, 0.0
    %v845 = vmax.f32 %v837, 0.0
    %v846 = vmax.f32 %v838, 0.0
    %v847 = vsel %vm300, %v839, 0.0
    %v848 = vsel %vm301, %v840, 0.0
    %v849 = vsel %vm302, %v841, 0.0
    %v850 = vsel %vm303, %v842, 0.0
    %v851 = vsel %vm304, %v843, 0.0
    %v852 = vsel %vm305, %v844, 0.0
    %v853 = vsel %vm306, %v845, 0.0
    %v854 = vsel %vm307, %v846, 0.0
    %v855 = vpack.c.bf16 %v848, %v847
    %v856 = vpack.c.bf16 %v850, %v849
    %v857 = vpack.c.bf16 %v852, %v851
    %v858 = vpack.c.bf16 %v854, %v853
    %v859 = vld [vmem:[#allocation4] sm:$0xf]
    %v860 = vld [vmem:[#allocation4 + $0x4] sm:$0xf]
    %v861 = vld [vmem:[#allocation4 + $0x8] sm:$0xf]
    %v862 = vld [vmem:[#allocation4 + $0xc] sm:$0xf]
    %v863 = vld [vmem:[#allocation4 + $0x10] sm:$0xf]
    %v864 = vld [vmem:[#allocation4 + $0x14] sm:$0xf]
    %v865 = vld [vmem:[#allocation4 + $0x18] sm:$0xf]
    %v866 = vld [vmem:[#allocation4 + $0x1c] sm:$0xf]
    %v867 = vld [vmem:[#allocation4 + $0x20] sm:$0xf]
    %v868 = vld [vmem:[#allocation4 + $0x24] sm:$0xf]
    %v869 = vld [vmem:[#allocation4 + $0x28] sm:$0xf]
    %v870 = vld [vmem:[#allocation4 + $0x2c] sm:$0xf]
    %v871 = vld [vmem:[#allocation4 + $0x30] sm:$0xf]
    %v872 = vld [vmem:[#allocation4 + $0x34] sm:$0xf]
    %v873 = vld [vmem:[#allocation4 + $0x38] sm:$0xf]
    %v874 = vld [vmem:[#allocation4 + $0x3c] sm:$0xf]
    %v891 = vunpack.c.l.b16 %v859
    %v892 = vunpack.c.l.b16 %v860
    %v893 = vunpack.c.l.b16 %v861
    %v894 = vunpack.c.l.b16 %v862
    %v895 = vunpack.c.l.b16 %v863
    %v896 = vunpack.c.l.b16 %v864
    %v897 = vunpack.c.l.b16 %v865
    %v898 = vunpack.c.l.b16 %v866
    %v899 = vunpack.c.l.b16 %v867
    %v900 = vunpack.c.l.b16 %v868
    %v901 = vunpack.c.l.b16 %v869
    %v902 = vunpack.c.l.b16 %v870
    %v903 = vunpack.c.l.b16 %v871
    %v904 = vunpack.c.l.b16 %v872
    %v905 = vunpack.c.l.b16 %v873
    %v906 = vunpack.c.l.b16 %v874
    %v907 = vpack.c.b16 %v892, %v891
    %v908 = vpack.c.b16 %v894, %v893
    %v909 = vpack.c.b16 %v896, %v895
    %v910 = vpack.c.b16 %v898, %v897
    %v911 = vpack.c.b16 %v900, %v899
    %v912 = vpack.c.b16 %v902, %v901
    %v913 = vpack.c.b16 %v904, %v903
    %v914 = vpack.c.b16 %v906, %v905
    %923 = vmatprep.subr.bf16.mxu0 0
    %924 = vmatpush1.bf16.msra.mxu0 %v914
    %925 = vmatprep.subr.bf16.mxu0 0
    %926 = vmatpush1.bf16.msra.mxu0 %v913
    %927 = vmatprep.subr.bf16.mxu0 0
    %928 = vmatpush1.bf16.msra.mxu0 %v912
    %929 = vmatprep.subr.bf16.mxu0 0
    %930 = vmatpush1.bf16.msra.mxu0 %v911
    %931 = vmatprep.subr.bf16.mxu0 0
    %932 = vmatpush1.bf16.msra.mxu0 %v910
    %933 = vmatprep.subr.bf16.mxu0 0
    %934 = vmatpush1.bf16.msra.mxu0 %v909
    %935 = vmatprep.subr.bf16.mxu0 0
    %936 = vmatpush1.bf16.msra.mxu0 %v908
    %937 = vmatprep.subr.bf16.mxu0 0
    %938 = vmatpush1.bf16.msra.mxu0 %v907
    %939 = vmatprep.subr.bf16.mxu0 0
    %940 = vmatpush2.bf16.msra.mxu0 0
    %941 = vmatprep.subr.bf16.mxu0 0
    %942 = vmatpush2.bf16.msra.mxu0 0
    %943 = vmatprep.subr.bf16.mxu0 0
    %944 = vmatpush2.bf16.msra.mxu0 0
    %945 = vmatprep.subr.bf16.mxu0 0
    %946 = vmatpush2.bf16.msra.mxu0 0
    %947 = vmatprep.subr.bf16.mxu0 0
    %948 = vmatpush2.bf16.msra.mxu0 0
    %949 = vmatprep.subr.bf16.mxu0 0
    %950 = vmatpush2.bf16.msra.mxu0 0
    %951 = vmatprep.subr.bf16.mxu0 0
    %952 = vmatpush2.bf16.msra.mxu0 0
    %953 = vmatprep.subr.bf16.mxu0 0
    %954 = vmatpush2.bf16.msra.mxu0 0
    %955 = vmatprep.mubr.bf16.mxu0 0
    %956 = vmatmul.mubr.bf16.gmra.mxu0 %v855
    %v957 = vpop.f32.mrf.mxu0
    %v958 = vadd.f32 0.0, %v957
    %v959 = vpop.f32.mrf.mxu0
    %v960 = vpop.f32.mrf.mxu0
    %v961 = vadd.f32 0.0, %v960
    %v962 = vpop.f32.mrf.mxu0
    %963 = vmatprep.mubr.bf16.mxu0 0
    %964 = vmatmul.mubr.bf16.gmra.mxu0 %v856
    %v965 = vpop.f32.mrf.mxu0
    %v966 = vadd.f32 0.0, %v965
    %v967 = vpop.f32.mrf.mxu0
    %v968 = vpop.f32.mrf.mxu0
    %v969 = vadd.f32 0.0, %v968
    %v970 = vpop.f32.mrf.mxu0
    %971 = vmatprep.mubr.bf16.mxu0 0
    %972 = vmatmul.mubr.bf16.gmra.mxu0 %v857
    %v973 = vpop.f32.mrf.mxu0
    %v974 = vadd.f32 0.0, %v973
    %v975 = vpop.f32.mrf.mxu0
    %v976 = vpop.f32.mrf.mxu0
    %v977 = vadd.f32 0.0, %v976
    %v978 = vpop.f32.mrf.mxu0
    %979 = vmatprep.mubr.bf16.mxu0 0
    %980 = vmatmul.mubr.bf16.gmra.mxu0 %v858
    %v981 = vpop.f32.mrf.mxu0
    %v982 = vadd.f32 0.0, %v981
    %v983 = vpop.f32.mrf.mxu0
    %v984 = vpop.f32.mrf.mxu0
    %v985 = vadd.f32 0.0, %v984
    %v986 = vpop.f32.mrf.mxu0
    %987 = vdwg.mxu0
    %v988 = vadd.f32 %v958, %v961
    %v989 = vadd.f32 %v988, %v966
    %v990 = vadd.f32 %v989, %v969
    %v991 = vadd.f32 %v990, %v974
    %v992 = vadd.f32 %v991, %v977
    %v993 = vadd.f32 %v992, %v982
    %v994 = vadd.f32 %v993, %v985
    %v995 = vrot.slane %v994, 4
    %v996 = vadd.f32 %v994, %v995
    %v997 = vrot.slane %v996, 2
    %v998 = vadd.f32 %v996, %v997
    %v999 = vrot.slane %v998, 1
    %v1000 = vadd.f32 %v998, %v999
    %v1001 = vmul.f32 %v1000, 0.016666668
    %v1002 = vsub.f32 %v958, %v1001
    %v1003 = vsub.f32 %v961, %v1001
    %v1004 = vsub.f32 %v966, %v1001
    %v1005 = vsub.f32 %v969, %v1001
    %v1006 = vsub.f32 %v974, %v1001
    %v1007 = vsub.f32 %v977, %v1001
    %v1008 = vsub.f32 %v982, %v1001
    %v1009 = vsub.f32 %v985, %v1001
    %v1010 = vsel %vm300, %v1002, 0.0
    %v1011 = vsel %vm301, %v1003, 0.0
    %v1012 = vsel %vm302, %v1004, 0.0
    %v1013 = vsel %vm303, %v1005, 0.0
    %v1014 = vsel %vm304, %v1006, 0.0
    %v1015 = vsel %vm305, %v1007, 0.0
    %v1016 = vsel %vm306, %v1008, 0.0
    %v1017 = vsel %vm307, %v1009, 0.0
    %v1018 = vmul.f32 %v1010, %v1010
    %v1019 = vmul.f32 %v1011, %v1011
    %v1020 = vmul.f32 %v1012, %v1012
    %v1021 = vmul.f32 %v1013, %v1013
    %v1022 = vmul.f32 %v1014, %v1014
    %v1023 = vmul.f32 %v1015, %v1015
    %v1024 = vmul.f32 %v1016, %v1016
    %v1025 = vmul.f32 %v1017, %v1017
    %v1026 = vadd.f32 %v1018, %v1019
    %v1027 = vadd.f32 %v1026, %v1020
    %v1028 = vadd.f32 %v1027, %v1021
    %v1029 = vadd.f32 %v1028, %v1022
    %v1030 = vadd.f32 %v1029, %v1023
    %v1031 = vadd.f32 %v1030, %v1024
    %v1032 = vadd.f32 %v1031, %v1025
    %v1033 = vrot.slane %v1032, 4
    %v1034 = vadd.f32 %v1032, %v1033
    %v1035 = vrot.slane %v1034, 2
    %v1036 = vadd.f32 %v1034, %v1035
    %v1037 = vrot.slane %v1036, 1
    %v1038 = vadd.f32 %v1036, %v1037
    %v1039 = vmul.f32 %v1038, 0.016666668
    %v1040 = vld [vmem:[%s13] sm:$0x1]
    %v1041 = vadd.f32 %v1039, 1e-05
    %v1042 = vrsqrt.pop %v1041
    %v1043 = vmul.f32 %v1040, %v1042
    %v1045 = vlaneseq
    %v1046 = vshrl.u32 %v1045, 7
    %v1047 = vsub.s32 0, %v1046
    %v1048 = vrot.slane %v1043, %v1047
    %v1050 = vmul.f32 %v1010, %v1048
    %v1051 = vmul.f32 %v1011, %v1048
    %v1052 = vmul.f32 %v1012, %v1048
    %v1053 = vmul.f32 %v1013, %v1048
    %v1054 = vmul.f32 %v1014, %v1048
    %v1055 = vmul.f32 %v1015, %v1048
    %v1056 = vmul.f32 %v1016, %v1048
    %v1057 = vmul.f32 %v1017, %v1048
    %v1058 = vld [vmem:[%s14] sm:$0x1]
    %v1060 = vlaneseq
    %v1061 = vshrl.u32 %v1060, 7
    %v1062 = vsub.s32 0, %v1061
    %v1063 = vrot.slane %v1058, %v1062
    %v1065 = vadd.f32 %v1050, %v1063
    %v1066 = vadd.f32 %v1051, %v1063
    %v1067 = vadd.f32 %v1052, %v1063
    %v1068 = vadd.f32 %v1053, %v1063
    %v1069 = vadd.f32 %v1054, %v1063
    %v1070 = vadd.f32 %v1055, %v1063
    %v1071 = vadd.f32 %v1056, %v1063
    %v1072 = vadd.f32 %v1057, %v1063
    %v1073 = vmax.f32 %v1065, 0.0
    %v1074 = vmax.f32 %v1066, 0.0
    %v1075 = vmax.f32 %v1067, 0.0
    %v1076 = vmax.f32 %v1068, 0.0
    %v1077 = vmax.f32 %v1069, 0.0
    %v1078 = vmax.f32 %v1070, 0.0
    %v1079 = vmax.f32 %v1071, 0.0
    %v1080 = vmax.f32 %v1072, 0.0
    %v1081 = vsel %vm300, %v1073, 0.0
    %v1082 = vsel %vm301, %v1074, 0.0
    %v1083 = vsel %vm302, %v1075, 0.0
    %v1084 = vsel %vm303, %v1076, 0.0
    %v1085 = vsel %vm304, %v1077, 0.0
    %v1086 = vsel %vm305, %v1078, 0.0
    %v1087 = vsel %vm306, %v1079, 0.0
    %v1088 = vsel %vm307, %v1080, 0.0
    %v1089 = vpack.c.bf16 %v1082, %v1081
    %v1090 = vpack.c.bf16 %v1084, %v1083
    %v1091 = vpack.c.bf16 %v1086, %v1085
    %v1092 = vpack.c.bf16 %v1088, %v1087
    %v1093 = vld [vmem:[#allocation6] sm:$0xf]
    %v1094 = vld [vmem:[#allocation6 + $0x4] sm:$0xf]
    %v1095 = vld [vmem:[#allocation6 + $0x8] sm:$0xf]
    %v1096 = vld [vmem:[#allocation6 + $0xc] sm:$0xf]
    %v1097 = vld [vmem:[#allocation6 + $0x10] sm:$0xf]
    %v1098 = vld [vmem:[#allocation6 + $0x14] sm:$0xf]
    %v1099 = vld [vmem:[#allocation6 + $0x18] sm:$0xf]
    %v1100 = vld [vmem:[#allocation6 + $0x1c] sm:$0xf]
    %v1101 = vld [vmem:[#allocation6 + $0x20] sm:$0xf]
    %v1102 = vld [vmem:[#allocation6 + $0x24] sm:$0xf]
    %v1103 = vld [vmem:[#allocation6 + $0x28] sm:$0xf]
    %v1104 = vld [vmem:[#allocation6 + $0x2c] sm:$0xf]
    %v1105 = vld [vmem:[#allocation6 + $0x30] sm:$0xf]
    %v1106 = vld [vmem:[#allocation6 + $0x34] sm:$0xf]
    %v1107 = vld [vmem:[#allocation6 + $0x38] sm:$0xf]
    %v1108 = vld [vmem:[#allocation6 + $0x3c] sm:$0xf]
    %v1109 = vld [vmem:[%s6] sm:$0x1]
    %v1111 = vlaneseq
    %v1112 = vshrl.u32 %v1111, 7
    %v1113 = vsub.s32 0, %v1112
    %v1114 = vrot.slane %v1109, %v1113
    %v1132 = vunpack.c.l.b16 %v1093
    %v1133 = vunpack.c.l.b16 %v1094
    %v1134 = vunpack.c.l.b16 %v1095
    %v1135 = vunpack.c.l.b16 %v1096
    %v1136 = vunpack.c.l.b16 %v1097
    %v1137 = vunpack.c.l.b16 %v1098
    %v1138 = vunpack.c.l.b16 %v1099
    %v1139 = vunpack.c.l.b16 %v1100
    %v1140 = vunpack.c.l.b16 %v1101
    %v1141 = vunpack.c.l.b16 %v1102
    %v1142 = vunpack.c.l.b16 %v1103
    %v1143 = vunpack.c.l.b16 %v1104
    %v1144 = vunpack.c.l.b16 %v1105
    %v1145 = vunpack.c.l.b16 %v1106
    %v1146 = vunpack.c.l.b16 %v1107
    %v1147 = vunpack.c.l.b16 %v1108
    %v1148 = vpack.c.b16 %v1133, %v1132
    %v1149 = vpack.c.b16 %v1135, %v1134
    %v1150 = vpack.c.b16 %v1137, %v1136
    %v1151 = vpack.c.b16 %v1139, %v1138
    %v1152 = vpack.c.b16 %v1141, %v1140
    %v1153 = vpack.c.b16 %v1143, %v1142
    %v1154 = vpack.c.b16 %v1145, %v1144
    %v1155 = vpack.c.b16 %v1147, %v1146
    %1164 = vmatprep.subr.bf16.mxu0 0
    %1165 = vmatpush1.bf16.msra.mxu0 %v1155
    %1166 = vmatprep.subr.bf16.mxu0 0
    %1167 = vmatpush1.bf16.msra.mxu0 %v1154
    %1168 = vmatprep.subr.bf16.mxu0 0
    %1169 = vmatpush1.bf16.msra.mxu0 %v1153
    %1170 = vmatprep.subr.bf16.mxu0 0
    %1171 = vmatpush1.bf16.msra.mxu0 %v1152
    %1172 = vmatprep.subr.bf16.mxu0 0
    %1173 = vmatpush1.bf16.msra.mxu0 %v1151
    %1174 = vmatprep.subr.bf16.mxu0 0
    %1175 = vmatpush1.bf16.msra.mxu0 %v1150
    %1176 = vmatprep.subr.bf16.mxu0 0
    %1177 = vmatpush1.bf16.msra.mxu0 %v1149
    %1178 = vmatprep.subr.bf16.mxu0 0
    %1179 = vmatpush1.bf16.msra.mxu0 %v1148
    %1180 = vmatprep.subr.bf16.mxu0 0
    %1181 = vmatpush2.bf16.msra.mxu0 0
    %1182 = vmatprep.subr.bf16.mxu0 0
    %1183 = vmatpush2.bf16.msra.mxu0 0
    %1184 = vmatprep.subr.bf16.mxu0 0
    %1185 = vmatpush2.bf16.msra.mxu0 0
    %1186 = vmatprep.subr.bf16.mxu0 0
    %1187 = vmatpush2.bf16.msra.mxu0 0
    %1188 = vmatprep.subr.bf16.mxu0 0
    %1189 = vmatpush2.bf16.msra.mxu0 0
    %1190 = vmatprep.subr.bf16.mxu0 0
    %1191 = vmatpush2.bf16.msra.mxu0 0
    %1192 = vmatprep.subr.bf16.mxu0 0
    %1193 = vmatpush2.bf16.msra.mxu0 0
    %1194 = vmatprep.subr.bf16.mxu0 0
    %1195 = vmatpush2.bf16.msra.mxu0 0
    %1196 = vmatprep.mubr.bf16.mxu0 0
    %1197 = vmatmul.mubr.bf16.gmra.mxu0 %v1089
    %v1198 = vpop.f32.mrf.mxu0
    %v1199 = vadd.f32 %v1114, %v1198
    %v1200 = vpop.f32.mrf.mxu0
    %v1201 = vpop.f32.mrf.mxu0
    %v1202 = vadd.f32 %v1114, %v1201
    %v1203 = vpop.f32.mrf.mxu0
    %1204 = vmatprep.mubr.bf16.mxu0 0
    %1205 = vmatmul.mubr.bf16.gmra.mxu0 %v1090
    %v1206 = vpop.f32.mrf.mxu0
    %v1207 = vadd.f32 %v1114, %v1206
    %v1208 = vpop.f32.mrf.mxu0
    %v1209 = vpop.f32.mrf.mxu0
    %v1210 = vadd.f32 %v1114, %v1209
    %v1211 = vpop.f32.mrf.mxu0
    %1212 = vmatprep.mubr.bf16.mxu0 0
    %1213 = vmatmul.mubr.bf16.gmra.mxu0 %v1091
    %v1214 = vpop.f32.mrf.mxu0
    %v1215 = vadd.f32 %v1114, %v1214
    %v1216 = vpop.f32.mrf.mxu0
    %v1217 = vpop.f32.mrf.mxu0
    %v1218 = vadd.f32 %v1114, %v1217
    %v1219 = vpop.f32.mrf.mxu0
    %1220 = vmatprep.mubr.bf16.mxu0 0
    %1221 = vmatmul.mubr.bf16.gmra.mxu0 %v1092
    %v1222 = vpop.f32.mrf.mxu0
    %v1223 = vadd.f32 %v1114, %v1222
    %v1224 = vpop.f32.mrf.mxu0
    %v1225 = vpop.f32.mrf.mxu0
    %v1226 = vadd.f32 %v1114, %v1225
    %v1227 = vpop.f32.mrf.mxu0
    %1228 = vdwg.mxu0
    %v1229 = vmin.f32 %v1199, 20.0
    %v1230 = vmin.f32 %v1202, 20.0
    %v1231 = vmin.f32 %v1207, 20.0
    %v1232 = vmin.f32 %v1210, 20.0
    %v1233 = vmin.f32 %v1215, 20.0
    %v1234 = vmin.f32 %v1218, 20.0
    %v1235 = vmin.f32 %v1223, 20.0
    %v1236 = vmin.f32 %v1226, 20.0
    %vm1237 = vcmp.gt.f32.partialorder %v1199, 20.0
    %vm1238 = vcmp.gt.f32.partialorder %v1202, 20.0
    %vm1239 = vcmp.gt.f32.partialorder %v1207, 20.0
    %vm1240 = vcmp.gt.f32.partialorder %v1210, 20.0
    %vm1241 = vcmp.gt.f32.partialorder %v1215, 20.0
    %vm1242 = vcmp.gt.f32.partialorder %v1218, 20.0
    %vm1243 = vcmp.gt.f32.partialorder %v1223, 20.0
    %vm1244 = vcmp.gt.f32.partialorder %v1226, 20.0
    %v1245 = vmul.f32 %v1229, 1.442695
    %v1246 = vpow.pop %v1245
    %v1247 = vmul.f32 %v1230, 1.442695
    %v1248 = vpow.pop %v1247
    %v1249 = vmul.f32 %v1231, 1.442695
    %v1250 = vpow.pop %v1249
    %v1251 = vmul.f32 %v1232, 1.442695
    %v1252 = vpow.pop %v1251
    %v1253 = vmul.f32 %v1233, 1.442695
    %v1254 = vpow.pop %v1253
    %v1255 = vmul.f32 %v1234, 1.442695
    %v1256 = vpow.pop %v1255
    %v1257 = vmul.f32 %v1235, 1.442695
    %v1258 = vpow.pop %v1257
    %v1259 = vmul.f32 %v1236, 1.442695
    %v1260 = vpow.pop %v1259
    %v1261 = vadd.f32 %v1246, 1.0
    %v1262 = vlog2.pop %v1261
    %v1263 = vmul.f32 %v1262, 0.6931472
    %v1264 = vmul.f32 -0.5, %v1246
    %v1265 = vadd.f32 %v1264, 1.0
    %v1266 = vmul.f32 %v1265, %v1246
    %v1267 = vand.u32 2147483647, %v1246
    %vm1268 = vcmp.lt.f32.partialorder %v1267, 0.0004427343
    %v1269 = vsel %vm1268, %v1266, %v1263
    %v1270 = vadd.f32 %v1248, 1.0
    %v1271 = vlog2.pop %v1270
    %v1272 = vmul.f32 %v1271, 0.6931472
    %v1273 = vmul.f32 -0.5, %v1248
    %v1274 = vadd.f32 %v1273, 1.0
    %v1275 = vmul.f32 %v1274, %v1248
    %v1276 = vand.u32 2147483647, %v1248
    %vm1277 = vcmp.lt.f32.partialorder %v1276, 0.0004427343
    %v1278 = vsel %vm1277, %v1275, %v1272
    %v1279 = vadd.f32 %v1250, 1.0
    %v1280 = vlog2.pop %v1279
    %v1281 = vmul.f32 %v1280, 0.6931472
    %v1282 = vmul.f32 -0.5, %v1250
    %v1283 = vadd.f32 %v1282, 1.0
    %v1284 = vmul.f32 %v1283, %v1250
    %v1285 = vand.u32 2147483647, %v1250
    %vm1286 = vcmp.lt.f32.partialorder %v1285, 0.0004427343
    %v1287 = vsel %vm1286, %v1284, %v1281
    %v1288 = vadd.f32 %v1252, 1.0
    %v1289 = vlog2.pop %v1288
    %v1290 = vmul.f32 %v1289, 0.6931472
    %v1291 = vmul.f32 -0.5, %v1252
    %v1292 = vadd.f32 %v1291, 1.0
    %v1293 = vmul.f32 %v1292, %v1252
    %v1294 = vand.u32 2147483647, %v1252
    %vm1295 = vcmp.lt.f32.partialorder %v1294, 0.0004427343
    %v1296 = vsel %vm1295, %v1293, %v1290
    %v1297 = vadd.f32 %v1254, 1.0
    %v1298 = vlog2.pop %v1297
    %v1299 = vmul.f32 %v1298, 0.6931472
    %v1300 = vmul.f32 -0.5, %v1254
    %v1301 = vadd.f32 %v1300, 1.0
    %v1302 = vmul.f32 %v1301, %v1254
    %v1303 = vand.u32 2147483647, %v1254
    %vm1304 = vcmp.lt.f32.partialorder %v1303, 0.0004427343
    %v1305 = vsel %vm1304, %v1302, %v1299
    %v1306 = vadd.f32 %v1256, 1.0
    %v1307 = vlog2.pop %v1306
    %v1308 = vmul.f32 %v1307, 0.6931472
    %v1309 = vmul.f32 -0.5, %v1256
    %v1310 = vadd.f32 %v1309, 1.0
    %v1311 = vmul.f32 %v1310, %v1256
    %v1312 = vand.u32 2147483647, %v1256
    %vm1313 = vcmp.lt.f32.partialorder %v1312, 0.0004427343
    %v1314 = vsel %vm1313, %v1311, %v1308
    %v1315 = vadd.f32 %v1258, 1.0
    %v1316 = vlog2.pop %v1315
    %v1317 = vmul.f32 %v1316, 0.6931472
    %v1318 = vmul.f32 -0.5, %v1258
    %v1319 = vadd.f32 %v1318, 1.0
    %v1320 = vmul.f32 %v1319, %v1258
    %v1321 = vand.u32 2147483647, %v1258
    %vm1322 = vcmp.lt.f32.partialorder %v1321, 0.0004427343
    %v1323 = vsel %vm1322, %v1320, %v1317
    %v1324 = vadd.f32 %v1260, 1.0
    %v1325 = vlog2.pop %v1324
    %v1326 = vmul.f32 %v1325, 0.6931472
    %v1327 = vmul.f32 -0.5, %v1260
    %v1328 = vadd.f32 %v1327, 1.0
    %v1329 = vmul.f32 %v1328, %v1260
    %v1330 = vand.u32 2147483647, %v1260
    %vm1331 = vcmp.lt.f32.partialorder %v1330, 0.0004427343
    %v1332 = vsel %vm1331, %v1329, %v1326
    %v1333 = vsel %vm1237, %v1199, %v1269
    %v1334 = vsel %vm1238, %v1202, %v1278
    %v1335 = vsel %vm1239, %v1207, %v1287
    %v1336 = vsel %vm1240, %v1210, %v1296
    %v1337 = vsel %vm1241, %v1215, %v1305
    %v1338 = vsel %vm1242, %v1218, %v1314
    %v1339 = vsel %vm1243, %v1223, %v1323
    %v1340 = vsel %vm1244, %v1226, %v1332
    %1341 = vst [vmem:[%s15] sm:$0xff] %v1333
    %1342 = vst [vmem:[%s15 + $0x8] sm:$0xff] %v1334
    %1343 = vst [vmem:[%s15 + $0x10] sm:$0xff] %v1335
    %1344 = vst [vmem:[%s15 + $0x18] sm:$0xff] %v1336
    %1345 = vst [vmem:[%s15 + $0x20] sm:$0xff] %v1337
    %1346 = vst [vmem:[%s15 + $0x28] sm:$0xff] %v1338
    %1347 = vst [vmem:[%s15 + $0x30] sm:$0xff] %v1339
    %1348 = vst [vmem:[%s15 + $0x38] sm:$0xff] %v1340
    // Predicated region
    $region74: #{mlp_bn_forward.1} parent=1 // pred_check
      _
    $region75: #{mlp_bn_forward.1} parent=1 // pred_check_branch
      %1350 = sbr.rel (0) target = $region77
    $region76: #{mlp_bn_forward.1} parent=1 // pred_region
      _
    $region77: #{mlp_bn_forward.1} parent=1 // pred_fallthru
      _
    // Predicated region
    $region78: #{mlp_bn_forward.1} parent=1 // pred_check
      _
    $region79: #{mlp_bn_forward.1} parent=1 // pred_check_branch
      %1352 = sbr.rel (0) target = $region81
    $region80: #{mlp_bn_forward.1} parent=1 // pred_region
      _
    $region81: #{mlp_bn_forward.1} parent=1 // pred_fallthru
      _
    %1353 = vsyncpa [#allocation3], 1
    %1354 = vsyncpa [#allocation5], 1

</llo_original>
